<compile_context>
chip_gen: v7x
topology: tpu7x:2x2x1
jax: 0.10.0
libtpu: 0.0.40
codegen_flags: <defaults>
</compile_context>

<pallas_src>
import jax
import jax.numpy as jnp
from jax import lax
from jax.experimental import pallas as pl
from jax.experimental.pallas import tpu as pltpu

C_IN = 256
C_OUT = 256
K = 5
STRIDE = 2
PAD = K // 2        # = 2
HALO = 2            # extra input rows a tile needs past its own span (taps +1, +2)
HALO_PAD = 16       # halo rounded up to the bf16 sublane tile (16)
MAX_TILE_L = 512    # output tile cap, sized from v7x's 64 MiB VMEM (works on v5e/v6e too)


def _round_up(x, m):
    return (x + m - 1) // m * m


def _conv1d_relu_kernel(yeo_ref, w_ref, o_ref):
    # yeo_ref: (B, 2, TLp, C_IN) bf16  [:, 0] = even-index samples, [:, 1] = odd
    # w_ref:   (K, C_OUT, C_IN)  bf16  w_ref[k] = weight[:, :, k] (resident block)
    # o_ref:   (B, C_OUT, TILE_L) f32  conv output tile, module layout
    B = o_ref.shape[0]
    tl = o_ref.shape[-1]
    # contract C_IN, which is the minor (lane) dim of BOTH operands -> (C_OUT, TILE_L)
    dn = (((1,), (1,)), ((), ()))

    # out[:, l] = sum_k W[:, :, k] @ y_pad[2l + k]
    #   k=0 -> ye[l], k=1 -> yo[l], k=2 -> ye[l+1], k=3 -> yo[l+1], k=4 -> ye[l+2]
    for b in range(B):  # B is a small static int; unrolled at trace time
        acc = lax.dot_general(w_ref[0], yeo_ref[b, 0, 0:tl, :], dn,
                              preferred_element_type=jnp.float32)
        acc += lax.dot_general(w_ref[1], yeo_ref[b, 1, 0:tl, :], dn,
                               preferred_element_type=jnp.float32)
        acc += lax.dot_general(w_ref[2], yeo_ref[b, 0, 1:tl + 1, :], dn,
                               preferred_element_type=jnp.float32)
        acc += lax.dot_general(w_ref[3], yeo_ref[b, 1, 1:tl + 1, :], dn,
                               preferred_element_type=jnp.float32)
        acc += lax.dot_general(w_ref[4], yeo_ref[b, 0, 2:tl + 2, :], dn,
                               preferred_element_type=jnp.float32)
        o_ref[b, :, :] = jnp.maximum(acc, 0.0).astype(o_ref.dtype)


@jax.jit
def linear_eca_block_reduce(x, weight):
    """x: (N, 256, H, W) f32; weight: (256, 256, 5) f32.

    Returns ReLU(Conv1d(256,256,k=5,s=2,p=2,bias=False)(flatten(x, 2))):
    (N, 256, L_out) f32 with L_out = floor((H*W - 1)/2) + 1.
    """
    N, C, H, W = x.shape
    assert C == C_IN and weight.shape == (C_OUT, C_IN, K)
    L = H * W
    L_out = (L + 2 * PAD - K) // STRIDE + 1

    # ---- flatten; pad L to even so the even/odd split is exact (the extra zero
    # lands in the conv's right zero-padding, results unchanged) ----
    y = x.reshape(N, C, L)
    if L % 2:
        y = jnp.pad(y, ((0, 0), (0, 0), (0, 1)))
    Lh = y.shape[-1] // 2
    assert Lh == L_out

    # ---- L_out tiling (TILE_L) and per-step batch block (B) ----
    if L_out <= MAX_TILE_L:
        TILE_L = _round_up(L_out, 16)      # single tile, common case
    else:
        TILE_L = MAX_TILE_L
    T = pl.cdiv(L_out, TILE_L)
    Lh_pad = T * TILE_L
    TLp = TILE_L + HALO_PAD

    # Double-buffered in+out bytes per batch element per step; keep blocks ~<=12 MiB.
    per_elem = 2 * (2 * TLp * C_IN * 2 + C_OUT * TILE_L * 4)
    B_cap = int(max(1, min(8, (12 * 2 ** 20) // per_elem)))
    divs = [d for d in range(1, min(N, B_cap) + 1) if N % d == 0]
    # Keep at least 2 parallel grid steps when possible (v7x has 2 TensorCores).
    good = [d for d in divs if (N // d) * T >= 2]
    B = max(good) if good else max(divs)

    # ---- even/odd de-interleave with the conv's zero padding folded in, in
    # (L, C) layout (channels on lanes) and bf16; one fused XLA pass over x ----
    y2 = y.reshape(N, C, Lh, 2)
    Lsrc = Lh_pad + HALO_PAD
    ye = jnp.pad(y2[..., 0], ((0, 0), (0, 0), (1, Lsrc - Lh - 1)))   # (N, C, Lsrc)
    yo = jnp.pad(y2[..., 1], ((0, 0), (0, 0), (1, Lsrc - Lh - 1)))   # (N, C, Lsrc)
    yeo = jnp.stack([ye, yo], axis=1)                                # (N, 2, C, Lsrc)
    yeo = yeo.transpose(0, 1, 3, 2).astype(jnp.bfloat16)             # (N, 2, Lsrc, C)

    # Window into overlapping (TILE_L + halo) tiles so the kernel needs no halo
    # logic; redundancy is only HALO_PAD/TILE_L of the input bytes.
    if T == 1:
        yeo_t = yeo[:, :, None, :, :]                                # (N, 2, 1, TLp, C)
    else:
        yeo_t = jnp.stack(
            [yeo[:, :, t * TILE_L:t * TILE_L + TLp, :] for t in range(T)], axis=2)

    # Per-tap weights in natural (C_OUT, C_IN) orientation, one resident block.
    w_taps = jnp.transpose(weight, (2, 0, 1)).astype(jnp.bfloat16)   # (K, C_OUT, C_IN)

    # Explicit scoped-VMEM limit: blocks (x2 buffers) + weights + accumulator + slack.
    est = (2 * (B * 2 * TLp * C_IN * 2 + B * C_OUT * TILE_L * 4)
           + 2 * K * C_OUT * C_IN * 2 + C_OUT * TILE_L * 4 + (2 << 20))
    vmem_limit = int(min(max(2 * est, 32 * 2 ** 20), 56 * 2 ** 20))

    out = pl.pallas_call(
        _conv1d_relu_kernel,
        out_shape=jax.ShapeDtypeStruct((N, C_OUT, Lh_pad), jnp.float32),
        grid_spec=pltpu.PrefetchScalarGridSpec(
            num_scalar_prefetch=0,
            grid=(N // B, T),
            in_specs=[
                # Stacked even/odd streams: one DMA descriptor pair per step.
                pl.BlockSpec((B, 2, None, TLp, C_IN), lambda nb, t: (nb, 0, t, 0, 0)),
                # Weights: constant index map -> resident across grid steps.
                pl.BlockSpec((K, C_OUT, C_IN), lambda nb, t: (0, 0, 0)),
            ],
            out_specs=pl.BlockSpec((B, C_OUT, TILE_L), lambda nb, t: (nb, 0, t)),
        ),
        compiler_params=pltpu.CompilerParams(
            dimension_semantics=("parallel", "parallel"),
            vmem_limit_bytes=vmem_limit,
        ),
    )(yeo_t, w_taps)

    # Only needed when L_out is not a multiple of 16 / TILE_L (never for the
    # common H, W multiples of 4); otherwise the kernel output is returned as-is.
    if Lh_pad != L_out:
        out = out[:, :, :L_out]
    return out


def _reference(x, weight):
    N, C, H, W = x.shape
    y = x.reshape(N, C, H * W)
    out = jax.lax.conv_general_dilated(
        y,
        weight,
        window_strides=(STRIDE,),
        padding=((PAD, PAD),),
        dimension_numbers=("NCH", "OIH", "NCH"),
    )
    return jnp.maximum(out, 0.0)


if __name__ == "__main__":
    key = jax.random.PRNGKey(0)
    kx, kw = jax.random.split(key)

    # Small shapes consistent with the module: channels fixed at 256 by the conv.
    N, H, W = 2, 16, 16
    x = jax.random.normal(kx, (N, C_IN, H, W), dtype=jnp.float32)
    weight = 0.05 * jax.random.normal(kw, (C_OUT, C_IN, K), dtype=jnp.float32)

    out = linear_eca_block_reduce(x, weight)
    out = jax.block_until_ready(out)

    ref = _reference(x, weight)
    assert out.shape == ref.shape, (out.shape, ref.shape)
    # bf16 operands (f32 accumulation) => relaxed tolerance vs the f32 reference.
    assert jnp.allclose(out, ref, atol=5e-2, rtol=5e-2), "mismatch vs reference"

    print("KERNEL_OK")
</pallas_src>

<mosaic_0001>
module attributes {stable_mosaic.version = 11 : i64} {
  func.func @_conv1d_relu_kernel(%arg0: i32, %arg1: i32, %arg2: memref<1x2x1x144x256xbf16, #tpu.memory_space<vmem>>, %arg3: memref<5x256x256xbf16, #tpu.memory_space<vmem>>, %arg4: memref<1x256x128xf32, #tpu.memory_space<vmem>>) attributes {dimension_semantics = [#tpu.dimension_semantics<parallel>, #tpu.dimension_semantics<parallel>], iteration_bounds = array<i64: 2, 1>, scalar_prefetch = 0 : i64, scratch_operands = 0 : i64, tpu.core_type = #tpu.core_type<tc>, window_params = [{transform_indices = @transform_0, window_bounds = array<i64: 1, 2, 1, 144, 256>}, {pipeline_mode = #tpu.pipeline_mode<synchronous>, transform_indices = @transform_1, window_bounds = array<i64: 5, 256, 256>}, {transform_indices = @transform_2, window_bounds = array<i64: 1, 256, 128>}]} {
    %c0 = arith.constant 0 : index
    %c0_0 = arith.constant 0 : index
    %c0_1 = arith.constant 0 : index
    %0 = vector.load %arg3[%c0, %c0_0, %c0_1] : memref<5x256x256xbf16, #tpu.memory_space<vmem>>, vector<1x256x256xbf16>
    %1 = vector.shape_cast %0 : vector<1x256x256xbf16> to vector<256x256xbf16>
    %c0_2 = arith.constant 0 : index
    %c0_3 = arith.constant 0 : index
    %c0_4 = arith.constant 0 : index
    %c0_5 = arith.constant 0 : index
    %c0_6 = arith.constant 0 : index
    %2 = vector.load %arg2[%c0_2, %c0_3, %c0_4, %c0_5, %c0_6] : memref<1x2x1x144x256xbf16, #tpu.memory_space<vmem>>, vector<1x1x1x128x256xbf16>
    %3 = vector.shape_cast %2 : vector<1x1x1x128x256xbf16> to vector<128x256xbf16>
    %cst = arith.constant dense<0.000000e+00> : vector<256x128xf32>
    %4 = tpu.matmul %1, %3, %cst {dimension_numbers = #tpu.dot_dimension_numbers<[1], [1], [0], [0], [0, 0, 1, 0], [], []>} : vector<256x256xbf16>, vector<128x256xbf16>, vector<256x128xf32> -> vector<256x128xf32>
    %c1 = arith.constant 1 : index
    %c0_7 = arith.constant 0 : index
    %c0_8 = arith.constant 0 : index
    %5 = vector.load %arg3[%c1, %c0_7, %c0_8] : memref<5x256x256xbf16, #tpu.memory_space<vmem>>, vector<1x256x256xbf16>
    %6 = vector.shape_cast %5 : vector<1x256x256xbf16> to vector<256x256xbf16>
    %c0_9 = arith.constant 0 : index
    %c1_10 = arith.constant 1 : index
    %c0_11 = arith.constant 0 : index
    %c0_12 = arith.constant 0 : index
    %c0_13 = arith.constant 0 : index
    %7 = vector.load %arg2[%c0_9, %c1_10, %c0_11, %c0_12, %c0_13] : memref<1x2x1x144x256xbf16, #tpu.memory_space<vmem>>, vector<1x1x1x128x256xbf16>
    %8 = vector.shape_cast %7 : vector<1x1x1x128x256xbf16> to vector<128x256xbf16>
    %cst_14 = arith.constant dense<0.000000e+00> : vector<256x128xf32>
    %9 = tpu.matmul %6, %8, %cst_14 {dimension_numbers = #tpu.dot_dimension_numbers<[1], [1], [0], [0], [0, 0, 1, 0], [], []>} : vector<256x256xbf16>, vector<128x256xbf16>, vector<256x128xf32> -> vector<256x128xf32>
    %10 = arith.addf %4, %9 : vector<256x128xf32>
    %c2 = arith.constant 2 : index
    %c0_15 = arith.constant 0 : index
    %c0_16 = arith.constant 0 : index
    %11 = vector.load %arg3[%c2, %c0_15, %c0_16] : memref<5x256x256xbf16, #tpu.memory_space<vmem>>, vector<1x256x256xbf16>
    %12 = vector.shape_cast %11 : vector<1x256x256xbf16> to vector<256x256xbf16>
    %c0_17 = arith.constant 0 : index
    %c0_18 = arith.constant 0 : index
    %c0_19 = arith.constant 0 : index
    %c1_20 = arith.constant 1 : index
    %c0_21 = arith.constant 0 : index
    %13 = vector.load %arg2[%c0_17, %c0_18, %c0_19, %c1_20, %c0_21] : memref<1x2x1x144x256xbf16, #tpu.memory_space<vmem>>, vector<1x1x1x128x256xbf16>
    %14 = vector.shape_cast %13 : vector<1x1x1x128x256xbf16> to vector<128x256xbf16>
    %cst_22 = arith.constant dense<0.000000e+00> : vector<256x128xf32>
    %15 = tpu.matmul %12, %14, %cst_22 {dimension_numbers = #tpu.dot_dimension_numbers<[1], [1], [0], [0], [0, 0, 1, 0], [], []>} : vector<256x256xbf16>, vector<128x256xbf16>, vector<256x128xf32> -> vector<256x128xf32>
    %16 = arith.addf %10, %15 : vector<256x128xf32>
    %c3 = arith.constant 3 : index
    %c0_23 = arith.constant 0 : index
    %c0_24 = arith.constant 0 : index
    %17 = vector.load %arg3[%c3, %c0_23, %c0_24] : memref<5x256x256xbf16, #tpu.memory_space<vmem>>, vector<1x256x256xbf16>
    %18 = vector.shape_cast %17 : vector<1x256x256xbf16> to vector<256x256xbf16>
    %c0_25 = arith.constant 0 : index
    %c1_26 = arith.constant 1 : index
    %c0_27 = arith.constant 0 : index
    %c1_28 = arith.constant 1 : index
    %c0_29 = arith.constant 0 : index
    %19 = vector.load %arg2[%c0_25, %c1_26, %c0_27, %c1_28, %c0_29] : memref<1x2x1x144x256xbf16, #tpu.memory_space<vmem>>, vector<1x1x1x128x256xbf16>
    %20 = vector.shape_cast %19 : vector<1x1x1x128x256xbf16> to vector<128x256xbf16>
    %cst_30 = arith.constant dense<0.000000e+00> : vector<256x128xf32>
    %21 = tpu.matmul %18, %20, %cst_30 {dimension_numbers = #tpu.dot_dimension_numbers<[1], [1], [0], [0], [0, 0, 1, 0], [], []>} : vector<256x256xbf16>, vector<128x256xbf16>, vector<256x128xf32> -> vector<256x128xf32>
    %22 = arith.addf %16, %21 : vector<256x128xf32>
    %c4 = arith.constant 4 : index
    %c0_31 = arith.constant 0 : index
    %c0_32 = arith.constant 0 : index
    %23 = vector.load %arg3[%c4, %c0_31, %c0_32] : memref<5x256x256xbf16, #tpu.memory_space<vmem>>, vector<1x256x256xbf16>
    %24 = vector.shape_cast %23 : vector<1x256x256xbf16> to vector<256x256xbf16>
    %c0_33 = arith.constant 0 : index
    %c0_34 = arith.constant 0 : index
    %c0_35 = arith.constant 0 : index
    %c2_36 = arith.constant 2 : index
    %c0_37 = arith.constant 0 : index
    %25 = vector.load %arg2[%c0_33, %c0_34, %c0_35, %c2_36, %c0_37] : memref<1x2x1x144x256xbf16, #tpu.memory_space<vmem>>, vector<1x1x1x128x256xbf16>
    %26 = vector.shape_cast %25 : vector<1x1x1x128x256xbf16> to vector<128x256xbf16>
    %cst_38 = arith.constant dense<0.000000e+00> : vector<256x128xf32>
    %27 = tpu.matmul %24, %26, %cst_38 {dimension_numbers = #tpu.dot_dimension_numbers<[1], [1], [0], [0], [0, 0, 1, 0], [], []>} : vector<256x256xbf16>, vector<128x256xbf16>, vector<256x128xf32> -> vector<256x128xf32>
    %28 = arith.addf %22, %27 : vector<256x128xf32>
    %cst_39 = arith.constant 0.000000e+00 : f32
    %29 = vector.broadcast %cst_39 : f32 to vector<256x128xf32>
    %30 = arith.maximumf %28, %29 : vector<256x128xf32>
    %c0_40 = arith.constant 0 : index
    %c0_41 = arith.constant 0 : index
    %c0_42 = arith.constant 0 : index
    %31 = vector.load %arg4[%c0_40, %c0_41, %c0_42] : memref<1x256x128xf32, #tpu.memory_space<vmem>>, vector<1x256x128xf32>
    %32 = vector.shape_cast %31 : vector<1x256x128xf32> to vector<256x128xf32>
    %33 = vector.shape_cast %30 : vector<256x128xf32> to vector<1x256x128xf32>
    tpu.vector_store %arg4[%c0_40, %c0_41, %c0_42], %33 {strides = array<i32>} : memref<1x256x128xf32, #tpu.memory_space<vmem>>, vector<1x256x128xf32>,
    return
  }
  func.func @transform_0(%arg0: i32, %arg1: i32) -> (i32, i32, i32, i32, i32) {
    %c0_i32 = arith.constant 0 : i32
    %c0_i32_0 = arith.constant 0 : i32
    %c0_i32_1 = arith.constant 0 : i32
    %c0_i32_2 = arith.constant 0 : i32
    return %arg0, %c0_i32, %arg1, %c0_i32_0, %c0_i32_1 : i32, i32, i32, i32, i32
  }
  func.func @transform_1(%arg0: i32, %arg1: i32) -> (i32, i32, i32) {
    %c0_i32 = arith.constant 0 : i32
    %c0_i32_0 = arith.constant 0 : i32
    %c0_i32_1 = arith.constant 0 : i32
    %c0_i32_2 = arith.constant 0 : i32
    return %c0_i32, %c0_i32_0, %c0_i32_1 : i32, i32, i32
  }
  func.func @transform_2(%arg0: i32, %arg1: i32) -> (i32, i32, i32) {
    %c0_i32 = arith.constant 0 : i32
    %c0_i32_0 = arith.constant 0 : i32
    return %arg0, %c0_i32, %arg1 : i32, i32, i32
  }
}

</mosaic_0001>

<llo_original>
// kernel: linear_eca_block_reduce.1
$region0: #{linear_eca_block_reduce.1}
  #allocation0 [shape = 'u32[]', space=smem, size = 0x4, offset = 0x4, fixed_abs, tag = 'smem constant byte address 0x4 - core index']
  #allocation1 [shape = 'u32[144,128]{1,0:T(1,128)}', space=vmem, size = 0x12000, scoped, tag = 'internal scratch']
  %s0 = inlined_call_operand.vmem [shape: bf16[2,2,1,144,256], index: 0, kind: input, shape index: {}]
  %s1 = inlined_call_operand.vmem [shape: bf16[5,256,256], index: 1, kind: input, shape index: {}]
  %s2 = inlined_call_operand.hbm [shape: f32[2,256,128], index: 2, kind: output, shape index: {}]
  %s3 = sld [smem:[#allocation0]]
  $region41: #{linear_eca_block_reduce.1} parent=0
    _
  %s5 = ssub.s32 1, %s3
  %s6 = scalar_select 0, %s5, %s3
  $region1: #{linear_eca_block_reduce.1} parent=0
    #allocation2 [shape = 'u8[262144]{0}', space=vmem, size = 0x40000, scoped, tag = 'output window, operand 0']
    #allocation3 [shape = 's32[2]{0}', space=sflag, size = 0x8, scoped, tag = 'scoped memory for linear_eca_block_reduce.1']
    %7 = vsyncpa [#allocation3], 0
    %s8 = scalar_lea.sflag [#allocation3], 1
    %9 = vsyncpa %s8, 0
    loop: start=0, step=1, limit=4
    $region2: #{linear_eca_block_reduce.1} parent=1 // loop_pre_header
      _
    $region3: #{linear_eca_block_reduce.1} parent=1 // loop_header
      %s11 = sphi 0, %s15
      %p12 = scmp.ge.s32.totalorder %s11, 4
      %s18 = sphi 0, %s30
      %s19 = sphi 0, %s26
      %s20 = sphi 0, %s18
      %s21 = sphi 0, %s19
      %s22 = sphi 0, %s20
      %s23 = sphi 0, %s21
      %s35 = sphi 0, %s37
      %s38 = sphi 0, %s35
      %s39 = sphi 0, %s38
      %s55 = sphi 0, %s39
      %s59 = sphi 0, %s59
      %s61 = sphi 0, %s59
      %s62 = sphi 0, %s61
      %s76 = sphi 0, %s62
      %s84 = sphi 0, %s86
      %s87 = sphi 0, %s84
      %s88 = sphi 0, %s87
      %s104 = sphi 0, %s88
    $region4: #{linear_eca_block_reduce.1} parent=1 // loop_header_branch
      %14 = sbr.rel (%p12) target = $region8
    $region5: #{linear_eca_block_reduce.1} parent=1 // loop_body
      %s16 = ssub.s32 %s11, 1
      %s17 = ssub.s32 %s11, 2
      %s24 = sadd.s32 1, %s19
      %p25 = scmp.ge.s32.totalorder %s24, 1
      %s26 = scalar_select %p25, 0, %s24
      %s27 = sadd.s32 1, %s18
      %s28 = scalar_select %p25, %s27, %s18
      %p29 = scmp.ge.s32.totalorder %s28, 2
      %s30 = scalar_select %p29, 0, %s28
      %s31 = ssub.s32 %s18, %s30
      %s32 = ssub.s32 %s19, %s26
      %s33 = sor.u32 %s31, %s32
      %p34 = scmp.eq.s32.totalorder %s33, 0
      %s36 = sadd.s32 %s35, 1
      %s37 = scalar_select %p34, %s35, %s36
      %p40 = pneg %p34
      %p41 = scmp.eq.s32.totalorder %s11, 1
      %p42 = por %p40, %p41
      %p43 = scmp.ne.s32.totalorder %s35, %s38
      %p44 = scmp.eq.s32.totalorder %s11, 0
      %p45 = por %p43, %p44
      %p46 = scmp.ne.s32.totalorder %s35, %s38
      %p47 = scmp.eq.s32.totalorder %s16, 1
      %p48 = por %p46, %p47
      %p49 = scmp.ne.s32.totalorder %s38, %s39
      %p50 = scmp.eq.s32.totalorder %s16, 0
      %p51 = por %p49, %p50
      %p52 = scmp.ne.s32.totalorder %s38, %s39
      %p53 = scmp.eq.s32.totalorder %s17, 1
      %p54 = por %p52, %p53
      %p56 = scmp.ne.s32.totalorder %s39, %s55
      %p57 = scmp.eq.s32.totalorder %s17, 0
      %p58 = por %p56, %p57
      %s60 = sadd.s32 %s59, 1
      %p63 = scmp.eq.s32.totalorder %s11, 1
      %p64 = scmp.ne.s32.totalorder %s59, %s61
      %p65 = scmp.eq.s32.totalorder %s11, 0
      %p66 = por %p64, %p65
      %p67 = scmp.ne.s32.totalorder %s59, %s61
      %p68 = scmp.eq.s32.totalorder %s16, 1
      %p69 = por %p67, %p68
      %p70 = scmp.ne.s32.totalorder %s61, %s62
      %p71 = scmp.eq.s32.totalorder %s16, 0
      %p72 = por %p70, %p71
      %p73 = scmp.ne.s32.totalorder %s61, %s62
      %p74 = scmp.eq.s32.totalorder %s17, 1
      %p75 = por %p73, %p74
      %p77 = scmp.ne.s32.totalorder %s62, %s76
      %p78 = scmp.eq.s32.totalorder %s17, 0
      %p79 = por %p77, %p78
      %s80 = ssub.s32 %s18, %s30
      %s81 = ssub.s32 %s19, %s26
      %s82 = sor.u32 %s80, %s81
      %p83 = scmp.eq.s32.totalorder %s82, 0
      %s85 = sadd.s32 %s84, 1
      %s86 = scalar_select %p83, %s84, %s85
      %p89 = pneg %p83
      %p90 = scmp.eq.s32.totalorder %s11, 1
      %p91 = por %p89, %p90
      %p92 = scmp.ne.s32.totalorder %s84, %s87
      %p93 = scmp.eq.s32.totalorder %s11, 0
      %p94 = por %p92, %p93
      %p95 = scmp.ne.s32.totalorder %s84, %s87
      %p96 = scmp.eq.s32.totalorder %s16, 1
      %p97 = por %p95, %p96
      %p98 = scmp.ne.s32.totalorder %s87, %s88
      %p99 = scmp.eq.s32.totalorder %s16, 0
      %p100 = por %p98, %p99
      %p101 = scmp.ne.s32.totalorder %s87, %s88
      %p102 = scmp.eq.s32.totalorder %s17, 1
      %p103 = por %p101, %p102
      %p105 = scmp.ne.s32.totalorder %s88, %s104
      %p106 = scmp.eq.s32.totalorder %s17, 0
      %p107 = por %p105, %p106
      %p108 = scmp.le.s32.totalorder 1, %s11
      %p109 = scmp.lt.s32.totalorder %s11, 3
      %p110 = pnand %p108, %p109
      %p111 = pneg %p110
      // Predicated region
      $region9: #{linear_eca_block_reduce.1} parent=5 // pred_check
        _
      $region10: #{linear_eca_block_reduce.1} parent=5 // pred_check_branch
        %113 = sbr.rel (%p110) target = $region12
      $region11: #{linear_eca_block_reduce.1} parent=5 // pred_region
        %s114 = ssub.s32 %s11, 1
        // Predicated region
        $region13: #{linear_eca_block_reduce.1} parent=11 // pred_check
          %p115 = pneg %p72
        $region14: #{linear_eca_block_reduce.1} parent=11 // pred_check_branch
          %117 = sbr.rel (%p115) target = $region16
        $region15: #{linear_eca_block_reduce.1} parent=11 // pred_region
          _
        $region16: #{linear_eca_block_reduce.1} parent=11 // pred_fallthru
          _
      $region12: #{linear_eca_block_reduce.1} parent=5 // pred_fallthru
        _
      %p118 = scmp.lt.s32.totalorder %s11, 2
      // Predicated region
      $region17: #{linear_eca_block_reduce.1} parent=5 // pred_check
        %p119 = pneg %p118
      $region18: #{linear_eca_block_reduce.1} parent=5 // pred_check_branch
        %121 = sbr.rel (%p119) target = $region20
      $region19: #{linear_eca_block_reduce.1} parent=5 // pred_region
        // Predicated region
        $region21: #{linear_eca_block_reduce.1} parent=19 // pred_check
          %p122 = pneg %p45
        $region22: #{linear_eca_block_reduce.1} parent=19 // pred_check_branch
          %124 = sbr.rel (%p122) target = $region24
        $region23: #{linear_eca_block_reduce.1} parent=19 // pred_region
          %p125 = scmp.lt.s32.totalorder %s18, 1
          %s126 = scalar_select %p125, %s18, 1
          %p127 = scmp.lt.s32.totalorder %s19, 0
          %s128 = scalar_select %p127, %s19, 0
          %s129 = smul.addr %s128, 36
          %s130 = smul.addr %s126, 72
          %s131 = sadd.s32 %s129, %s130
          %s132 = smul.addr %s131, 4
          %s133 = scalar_lea.vmem %s0, %s132
        $region24: #{linear_eca_block_reduce.1} parent=19 // pred_fallthru
          _
      $region20: #{linear_eca_block_reduce.1} parent=5 // pred_fallthru
        _
      %p134 = scmp.le.s32.totalorder 1, %s11
      %p135 = scmp.lt.s32.totalorder %s11, 3
      %p136 = pnand %p134, %p135
      %p137 = pneg %p136
      // Predicated region
      $region25: #{linear_eca_block_reduce.1} parent=5 // pred_check
        _
      $region26: #{linear_eca_block_reduce.1} parent=5 // pred_check_branch
        %139 = sbr.rel (%p136) target = $region28
      $region27: #{linear_eca_block_reduce.1} parent=5 // pred_region
        %s140 = ssub.s32 %s11, 1
        %p141 = scmp.lt.s32.totalorder %s20, 1
        %s142 = scalar_select %p141, %s20, 1
        %p143 = scmp.lt.s32.totalorder %s21, 0
        %s144 = scalar_select %p143, %s21, 0
        %s145 = smul.addr %s144, 36
        %s146 = smul.addr %s142, 72
        %s147 = sadd.s32 %s145, %s146
        %s148 = smul.addr %s147, 4
        %s149 = scalar_lea.vmem %s0, %s148
        %p150 = pneg %p51
        %p151 = pneg %p48
        %p152 = pneg %p72
        %p153 = pneg %p69
        %p154 = pneg %p100
        %p155 = pneg %p97
        %s156 = sand.u32 %s87, 1
        %s157 = scalar_lea.sflag [#allocation3], %s156
        %s158 = sand.u32 %s87, 1
        %s159 = smul.addr %s158, 256
        %s160 = scalar_lea.vmem [#allocation2], %s159
        %p161 = scmp.lt.s32.totalorder %s20, 1
        %s162 = scalar_select %p161, %s20, 1
        %p163 = scmp.lt.s32.totalorder %s21, 0
        %s164 = scalar_select %p163, %s21, 0
        %s165 = smul.addr %s164, 36
        %s166 = smul.addr %s162, 72
        %s167 = sadd.s32 %s165, %s166
        %s168 = smul.addr %s167, 4
        %s169 = scalar_lea.vmem %s0, %s168
        %v171 = vld [vmem:[%s1] sm:$0xff]
        %v172 = vld [vmem:[%s1 + $0x8] sm:$0xff]
        %v173 = vld [vmem:[%s1 + $0x10] sm:$0xff]
        %v174 = vld [vmem:[%s1 + $0x18] sm:$0xff]
        %v175 = vld [vmem:[%s1 + $0x20] sm:$0xff]
        %v176 = vld [vmem:[%s1 + $0x28] sm:$0xff]
        %v177 = vld [vmem:[%s1 + $0x30] sm:$0xff]
        %v178 = vld [vmem:[%s1 + $0x38] sm:$0xff]
        %v179 = vld [vmem:[%s1 + $0x40] sm:$0xff]
        %v180 = vld [vmem:[%s1 + $0x48] sm:$0xff]
        %v181 = vld [vmem:[%s1 + $0x50] sm:$0xff]
        %v182 = vld [vmem:[%s1 + $0x58] sm:$0xff]
        %v183 = vld [vmem:[%s1 + $0x60] sm:$0xff]
        %v184 = vld [vmem:[%s1 + $0x68] sm:$0xff]
        %v185 = vld [vmem:[%s1 + $0x70] sm:$0xff]
        %v186 = vld [vmem:[%s1 + $0x78] sm:$0xff]
        %v187 = vld [vmem:[%s1 + $0x80] sm:$0xff]
        %v188 = vld [vmem:[%s1 + $0x88] sm:$0xff]
        %v189 = vld [vmem:[%s1 + $0x90] sm:$0xff]
        %v190 = vld [vmem:[%s1 + $0x98] sm:$0xff]
        %v191 = vld [vmem:[%s1 + $0xa0] sm:$0xff]
        %v192 = vld [vmem:[%s1 + $0xa8] sm:$0xff]
        %v193 = vld [vmem:[%s1 + $0xb0] sm:$0xff]
        %v194 = vld [vmem:[%s1 + $0xb8] sm:$0xff]
        %v195 = vld [vmem:[%s1 + $0xc0] sm:$0xff]
        %v196 = vld [vmem:[%s1 + $0xc8] sm:$0xff]
        %v197 = vld [vmem:[%s1 + $0xd0] sm:$0xff]
        %v198 = vld [vmem:[%s1 + $0xd8] sm:$0xff]
        %v199 = vld [vmem:[%s1 + $0xe0] sm:$0xff]
        %v200 = vld [vmem:[%s1 + $0xe8] sm:$0xff]
        %v201 = vld [vmem:[%s1 + $0xf0] sm:$0xff]
        %v202 = vld [vmem:[%s1 + $0xf8] sm:$0xff]
        %v203 = vld [vmem:[%s169] sm:$0xff]
        %v204 = vld [vmem:[%s169 + $0x8] sm:$0xff]
        %v205 = vld [vmem:[%s169 + $0x10] sm:$0xff]
        %v206 = vld [vmem:[%s169 + $0x18] sm:$0xff]
        %v207 = vld [vmem:[%s169 + $0x20] sm:$0xff]
        %v208 = vld [vmem:[%s169 + $0x28] sm:$0xff]
        %v209 = vld [vmem:[%s169 + $0x30] sm:$0xff]
        %v210 = vld [vmem:[%s169 + $0x38] sm:$0xff]
        %v211 = vld [vmem:[%s169 + $0x40] sm:$0xff]
        %v212 = vld [vmem:[%s169 + $0x48] sm:$0xff]
        %v213 = vld [vmem:[%s169 + $0x50] sm:$0xff]
        %v214 = vld [vmem:[%s169 + $0x58] sm:$0xff]
        %v215 = vld [vmem:[%s169 + $0x60] sm:$0xff]
        %v216 = vld [vmem:[%s169 + $0x68] sm:$0xff]
        %v217 = vld [vmem:[%s169 + $0x70] sm:$0xff]
        %v218 = vld [vmem:[%s169 + $0x78] sm:$0xff]
        %s219 = scalar_lea.vmem %s1, 256
        %v220 = vld [vmem:[%s219] sm:$0xff]
        %v221 = vld [vmem:[%s219 + $0x8] sm:$0xff]
        %v222 = vld [vmem:[%s219 + $0x10] sm:$0xff]
        %v223 = vld [vmem:[%s219 + $0x18] sm:$0xff]
        %v224 = vld [vmem:[%s219 + $0x20] sm:$0xff]
        %v225 = vld [vmem:[%s219 + $0x28] sm:$0xff]
        %v226 = vld [vmem:[%s219 + $0x30] sm:$0xff]
        %v227 = vld [vmem:[%s219 + $0x38] sm:$0xff]
        %v228 = vld [vmem:[%s219 + $0x40] sm:$0xff]
        %v229 = vld [vmem:[%s219 + $0x48] sm:$0xff]
        %v230 = vld [vmem:[%s219 + $0x50] sm:$0xff]
        %v231 = vld [vmem:[%s219 + $0x58] sm:$0xff]
        %v232 = vld [vmem:[%s219 + $0x60] sm:$0xff]
        %v233 = vld [vmem:[%s219 + $0x68] sm:$0xff]
        %v234 = vld [vmem:[%s219 + $0x70] sm:$0xff]
        %v235 = vld [vmem:[%s219 + $0x78] sm:$0xff]
        %v236 = vld [vmem:[%s219 + $0x80] sm:$0xff]
        %v237 = vld [vmem:[%s219 + $0x88] sm:$0xff]
        %v238 = vld [vmem:[%s219 + $0x90] sm:$0xff]
        %v239 = vld [vmem:[%s219 + $0x98] sm:$0xff]
        %v240 = vld [vmem:[%s219 + $0xa0] sm:$0xff]
        %v241 = vld [vmem:[%s219 + $0xa8] sm:$0xff]
        %v242 = vld [vmem:[%s219 + $0xb0] sm:$0xff]
        %v243 = vld [vmem:[%s219 + $0xb8] sm:$0xff]
        %v244 = vld [vmem:[%s219 + $0xc0] sm:$0xff]
        %v245 = vld [vmem:[%s219 + $0xc8] sm:$0xff]
        %v246 = vld [vmem:[%s219 + $0xd0] sm:$0xff]
        %v247 = vld [vmem:[%s219 + $0xd8] sm:$0xff]
        %v248 = vld [vmem:[%s219 + $0xe0] sm:$0xff]
        %v249 = vld [vmem:[%s219 + $0xe8] sm:$0xff]
        %v250 = vld [vmem:[%s219 + $0xf0] sm:$0xff]
        %v251 = vld [vmem:[%s219 + $0xf8] sm:$0xff]
        %s252 = scalar_lea.vmem %s169, 144
        %v253 = vld [vmem:[%s252] sm:$0xff]
        %v254 = vld [vmem:[%s252 + $0x8] sm:$0xff]
        %v255 = vld [vmem:[%s252 + $0x10] sm:$0xff]
        %v256 = vld [vmem:[%s252 + $0x18] sm:$0xff]
        %v257 = vld [vmem:[%s252 + $0x20] sm:$0xff]
        %v258 = vld [vmem:[%s252 + $0x28] sm:$0xff]
        %v259 = vld [vmem:[%s252 + $0x30] sm:$0xff]
        %v260 = vld [vmem:[%s252 + $0x38] sm:$0xff]
        %v261 = vld [vmem:[%s252 + $0x40] sm:$0xff]
        %v262 = vld [vmem:[%s252 + $0x48] sm:$0xff]
        %v263 = vld [vmem:[%s252 + $0x50] sm:$0xff]
        %v264 = vld [vmem:[%s252 + $0x58] sm:$0xff]
        %v265 = vld [vmem:[%s252 + $0x60] sm:$0xff]
        %v266 = vld [vmem:[%s252 + $0x68] sm:$0xff]
        %v267 = vld [vmem:[%s252 + $0x70] sm:$0xff]
        %v268 = vld [vmem:[%s252 + $0x78] sm:$0xff]
        %v301 = vunpack.c.l.b16 %v220
        %v302 = vunpack.c.h.b16 %v220
        %v303 = vunpack.c.l.b16 %v221
        %v304 = vunpack.c.h.b16 %v221
        %v305 = vunpack.c.l.b16 %v222
        %v306 = vunpack.c.h.b16 %v222
        %v307 = vunpack.c.l.b16 %v223
        %v308 = vunpack.c.h.b16 %v223
        %v309 = vunpack.c.l.b16 %v224
        %v310 = vunpack.c.h.b16 %v224
        %v311 = vunpack.c.l.b16 %v225
        %v312 = vunpack.c.h.b16 %v225
        %v313 = vunpack.c.l.b16 %v226
        %v314 = vunpack.c.h.b16 %v226
        %v315 = vunpack.c.l.b16 %v227
        %v316 = vunpack.c.h.b16 %v227
        %v317 = vunpack.c.l.b16 %v228
        %v318 = vunpack.c.h.b16 %v228
        %v319 = vunpack.c.l.b16 %v229
        %v320 = vunpack.c.h.b16 %v229
        %v321 = vunpack.c.l.b16 %v230
        %v322 = vunpack.c.h.b16 %v230
        %v323 = vunpack.c.l.b16 %v231
        %v324 = vunpack.c.h.b16 %v231
        %v325 = vunpack.c.l.b16 %v232
        %v326 = vunpack.c.h.b16 %v232
        %v327 = vunpack.c.l.b16 %v233
        %v328 = vunpack.c.h.b16 %v233
        %v329 = vunpack.c.l.b16 %v234
        %v330 = vunpack.c.h.b16 %v234
        %v331 = vunpack.c.l.b16 %v235
        %v332 = vunpack.c.h.b16 %v235
        %v333 = vunpack.c.l.b16 %v236
        %v334 = vunpack.c.h.b16 %v236
        %v335 = vunpack.c.l.b16 %v237
        %v336 = vunpack.c.h.b16 %v237
        %v337 = vunpack.c.l.b16 %v238
        %v338 = vunpack.c.h.b16 %v238
        %v339 = vunpack.c.l.b16 %v239
        %v340 = vunpack.c.h.b16 %v239
        %v341 = vunpack.c.l.b16 %v240
        %v342 = vunpack.c.h.b16 %v240
        %v343 = vunpack.c.l.b16 %v241
        %v344 = vunpack.c.h.b16 %v241
        %v345 = vunpack.c.l.b16 %v242
        %v346 = vunpack.c.h.b16 %v242
        %v347 = vunpack.c.l.b16 %v243
        %v348 = vunpack.c.h.b16 %v243
        %v349 = vunpack.c.l.b16 %v244
        %v350 = vunpack.c.h.b16 %v244
        %v351 = vunpack.c.l.b16 %v245
        %v352 = vunpack.c.h.b16 %v245
        %v353 = vunpack.c.l.b16 %v246
        %v354 = vunpack.c.h.b16 %v246
        %v355 = vunpack.c.l.b16 %v247
        %v356 = vunpack.c.h.b16 %v247
        %v357 = vunpack.c.l.b16 %v248
        %v358 = vunpack.c.h.b16 %v248
        %v359 = vunpack.c.l.b16 %v249
        %v360 = vunpack.c.h.b16 %v249
        %v361 = vunpack.c.l.b16 %v250
        %v362 = vunpack.c.h.b16 %v250
        %v363 = vunpack.c.l.b16 %v251
        %v364 = vunpack.c.h.b16 %v251
        %v365 = vpack.c.b16 %v303, %v301
        %v366 = vpack.c.b16 %v304, %v302
        %v367 = vpack.c.b16 %v307, %v305
        %v368 = vpack.c.b16 %v308, %v306
        %v369 = vpack.c.b16 %v311, %v309
        %v370 = vpack.c.b16 %v312, %v310
        %v371 = vpack.c.b16 %v315, %v313
        %v372 = vpack.c.b16 %v316, %v314
        %v373 = vpack.c.b16 %v319, %v317
        %v374 = vpack.c.b16 %v320, %v318
        %v375 = vpack.c.b16 %v323, %v321
        %v376 = vpack.c.b16 %v324, %v322
        %v377 = vpack.c.b16 %v327, %v325
        %v378 = vpack.c.b16 %v328, %v326
        %v379 = vpack.c.b16 %v331, %v329
        %v380 = vpack.c.b16 %v332, %v330
        %v381 = vpack.c.b16 %v335, %v333
        %v382 = vpack.c.b16 %v336, %v334
        %v383 = vpack.c.b16 %v339, %v337
        %v384 = vpack.c.b16 %v340, %v338
        %v385 = vpack.c.b16 %v343, %v341
        %v386 = vpack.c.b16 %v344, %v342
        %v387 = vpack.c.b16 %v347, %v345
        %v388 = vpack.c.b16 %v348, %v346
        %v389 = vpack.c.b16 %v351, %v349
        %v390 = vpack.c.b16 %v352, %v350
        %v391 = vpack.c.b16 %v355, %v353
        %v392 = vpack.c.b16 %v356, %v354
        %v393 = vpack.c.b16 %v359, %v357
        %v394 = vpack.c.b16 %v360, %v358
        %v395 = vpack.c.b16 %v363, %v361
        %v396 = vpack.c.b16 %v364, %v362
        %v445 = vunpack.c.l.b16 %v253
        %v446 = vunpack.c.h.b16 %v253
        %v447 = vunpack.c.l.b16 %v254
        %v448 = vunpack.c.h.b16 %v254
        %v449 = vunpack.c.l.b16 %v255
        %v450 = vunpack.c.h.b16 %v255
        %v451 = vunpack.c.l.b16 %v256
        %v452 = vunpack.c.h.b16 %v256
        %v453 = vunpack.c.l.b16 %v257
        %v454 = vunpack.c.h.b16 %v257
        %v455 = vunpack.c.l.b16 %v258
        %v456 = vunpack.c.h.b16 %v258
        %v457 = vunpack.c.l.b16 %v259
        %v458 = vunpack.c.h.b16 %v259
        %v459 = vunpack.c.l.b16 %v260
        %v460 = vunpack.c.h.b16 %v260
        %v461 = vunpack.c.l.b16 %v261
        %v462 = vunpack.c.h.b16 %v261
        %v463 = vunpack.c.l.b16 %v262
        %v464 = vunpack.c.h.b16 %v262
        %v465 = vunpack.c.l.b16 %v263
        %v466 = vunpack.c.h.b16 %v263
        %v467 = vunpack.c.l.b16 %v264
        %v468 = vunpack.c.h.b16 %v264
        %v469 = vunpack.c.l.b16 %v265
        %v470 = vunpack.c.h.b16 %v265
        %v471 = vunpack.c.l.b16 %v266
        %v472 = vunpack.c.h.b16 %v266
        %v473 = vunpack.c.l.b16 %v267
        %v474 = vunpack.c.h.b16 %v267
        %v475 = vunpack.c.l.b16 %v268
        %v476 = vunpack.c.h.b16 %v268
        %v477 = vpack.c.b16 %v447, %v445
        %v478 = vpack.c.b16 %v448, %v446
        %v479 = vpack.c.b16 %v451, %v449
        %v480 = vpack.c.b16 %v452, %v450
        %v481 = vpack.c.b16 %v455, %v453
        %v482 = vpack.c.b16 %v456, %v454
        %v483 = vpack.c.b16 %v459, %v457
        %v484 = vpack.c.b16 %v460, %v458
        %v485 = vpack.c.b16 %v463, %v461
        %v486 = vpack.c.b16 %v464, %v462
        %v487 = vpack.c.b16 %v467, %v465
        %v488 = vpack.c.b16 %v468, %v466
        %v489 = vpack.c.b16 %v471, %v469
        %v490 = vpack.c.b16 %v472, %v470
        %v491 = vpack.c.b16 %v475, %v473
        %v492 = vpack.c.b16 %v476, %v474
        %509 = vmatprep.subr.bf16.mxu0 %v478
        %510 = vmatpush1.bf16.xpose.msra.mxu0 %v477
        %511 = vmatprep.subr.bf16.mxu0 %v480
        %512 = vmatpush1.bf16.xpose.msra.mxu0 %v479
        %513 = vmatprep.subr.bf16.mxu0 %v482
        %514 = vmatpush1.bf16.xpose.msra.mxu0 %v481
        %515 = vmatprep.subr.bf16.mxu0 %v484
        %516 = vmatpush1.bf16.xpose.msra.mxu0 %v483
        %517 = vmatprep.subr.bf16.mxu0 %v486
        %518 = vmatpush1.bf16.xpose.msra.mxu0 %v485
        %519 = vmatprep.subr.bf16.mxu0 %v488
        %520 = vmatpush1.bf16.xpose.msra.mxu0 %v487
        %521 = vmatprep.subr.bf16.mxu0 %v490
        %522 = vmatpush1.bf16.xpose.msra.mxu0 %v489
        %523 = vmatprep.subr.bf16.mxu0 %v492
        %524 = vmatpush1.bf16.xpose.msra.mxu0 %v491
        %525 = vmatprep.subr.bf16.mxu0 0
        %526 = vmatpush1.bf16.xpose.msra.mxu0 0
        %527 = vmatprep.subr.bf16.mxu0 0
        %528 = vmatpush1.bf16.xpose.msra.mxu0 0
        %529 = vmatprep.subr.bf16.mxu0 0
        %530 = vmatpush1.bf16.xpose.msra.mxu0 0
        %531 = vmatprep.subr.bf16.mxu0 0
        %532 = vmatpush1.bf16.xpose.msra.mxu0 0
        %533 = vmatprep.subr.bf16.mxu0 0
        %534 = vmatpush1.bf16.xpose.msra.mxu0 0
        %535 = vmatprep.subr.bf16.mxu0 0
        %536 = vmatpush1.bf16.xpose.msra.mxu0 0
        %537 = vmatprep.subr.bf16.mxu0 0
        %538 = vmatpush1.bf16.xpose.msra.mxu0 0
        %539 = vmatprep.subr.bf16.mxu0 0
        %540 = vmatpush1.bf16.xpose.msra.mxu0 0
        %541 = vmatprep.mubr.bf16.mxu0 %v366
        %542 = vmatmul.mubr.bf16.gmra.mrb[0].mxu0 %v365
        %v543 = vpop.f32.mrb[0].mxu0
        %v544 = vadd.f32 0.0, %v543
        %v545 = vpop.f32.mrb[0].mxu0
        %v546 = vpop.f32.mrb[0].mxu0
        %v547 = vadd.f32 0.0, %v546
        %v548 = vpop.f32.mrb[0].mxu0
        %549 = vmatprep.mubr.bf16.mxu0 %v368
        %550 = vmatmul.mubr.bf16.gmra.mrb[0].mxu0 %v367
        %v551 = vpop.f32.mrb[0].mxu0
        %v552 = vadd.f32 0.0, %v551
        %v553 = vpop.f32.mrb[0].mxu0
        %v554 = vpop.f32.mrb[0].mxu0
        %v555 = vadd.f32 0.0, %v554
        %v556 = vpop.f32.mrb[0].mxu0
        %557 = vmatprep.mubr.bf16.mxu0 %v370
        %558 = vmatmul.mubr.bf16.gmra.mrb[0].mxu0 %v369
        %v559 = vpop.f32.mrb[0].mxu0
        %v560 = vadd.f32 0.0, %v559
        %v561 = vpop.f32.mrb[0].mxu0
        %v562 = vpop.f32.mrb[0].mxu0
        %v563 = vadd.f32 0.0, %v562
        %v564 = vpop.f32.mrb[0].mxu0
        %565 = vmatprep.mubr.bf16.mxu0 %v372
        %566 = vmatmul.mubr.bf16.gmra.mrb[0].mxu0 %v371
        %v567 = vpop.f32.mrb[0].mxu0
        %v568 = vadd.f32 0.0, %v567
        %v569 = vpop.f32.mrb[0].mxu0
        %v570 = vpop.f32.mrb[0].mxu0
        %v571 = vadd.f32 0.0, %v570
        %v572 = vpop.f32.mrb[0].mxu0
        %573 = vmatprep.mubr.bf16.mxu0 %v374
        %574 = vmatmul.mubr.bf16.gmra.mrb[0].mxu0 %v373
        %v575 = vpop.f32.mrb[0].mxu0
        %v576 = vadd.f32 0.0, %v575
        %v577 = vpop.f32.mrb[0].mxu0
        %v578 = vpop.f32.mrb[0].mxu0
        %v579 = vadd.f32 0.0, %v578
        %v580 = vpop.f32.mrb[0].mxu0
        %581 = vmatprep.mubr.bf16.mxu0 %v376
        %582 = vmatmul.mubr.bf16.gmra.mrb[0].mxu0 %v375
        %v583 = vpop.f32.mrb[0].mxu0
        %v584 = vadd.f32 0.0, %v583
        %v585 = vpop.f32.mrb[0].mxu0
        %v586 = vpop.f32.mrb[0].mxu0
        %v587 = vadd.f32 0.0, %v586
        %v588 = vpop.f32.mrb[0].mxu0
        %589 = vmatprep.mubr.bf16.mxu0 %v378
        %590 = vmatmul.mubr.bf16.gmra.mrb[0].mxu0 %v377
        %v591 = vpop.f32.mrb[0].mxu0
        %v592 = vadd.f32 0.0, %v591
        %v593 = vpop.f32.mrb[0].mxu0
        %v594 = vpop.f32.mrb[0].mxu0
        %v595 = vadd.f32 0.0, %v594
        %v596 = vpop.f32.mrb[0].mxu0
        %597 = vmatprep.mubr.bf16.mxu0 %v380
        %598 = vmatmul.mubr.bf16.gmra.mrb[0].mxu0 %v379
        %v599 = vpop.f32.mrb[0].mxu0
        %v600 = vadd.f32 0.0, %v599
        %v601 = vpop.f32.mrb[0].mxu0
        %v602 = vpop.f32.mrb[0].mxu0
        %v603 = vadd.f32 0.0, %v602
        %v604 = vpop.f32.mrb[0].mxu0
        %605 = vmatprep.mubr.bf16.mxu0 %v382
        %606 = vmatmul.mubr.bf16.gmra.mrb[0].mxu0 %v381
        %v607 = vpop.f32.mrb[0].mxu0
        %v608 = vadd.f32 0.0, %v607
        %v609 = vpop.f32.mrb[0].mxu0
        %v610 = vpop.f32.mrb[0].mxu0
        %v611 = vadd.f32 0.0, %v610
        %v612 = vpop.f32.mrb[0].mxu0
        %613 = vmatprep.mubr.bf16.mxu0 %v384
        %614 = vmatmul.mubr.bf16.gmra.mrb[0].mxu0 %v383
        %v615 = vpop.f32.mrb[0].mxu0
        %v616 = vadd.f32 0.0, %v615
        %v617 = vpop.f32.mrb[0].mxu0
        %v618 = vpop.f32.mrb[0].mxu0
        %v619 = vadd.f32 0.0, %v618
        %v620 = vpop.f32.mrb[0].mxu0
        %621 = vmatprep.mubr.bf16.mxu0 %v386
        %622 = vmatmul.mubr.bf16.gmra.mrb[0].mxu0 %v385
        %v623 = vpop.f32.mrb[0].mxu0
        %v624 = vadd.f32 0.0, %v623
        %v625 = vpop.f32.mrb[0].mxu0
        %v626 = vpop.f32.mrb[0].mxu0
        %v627 = vadd.f32 0.0, %v626
        %v628 = vpop.f32.mrb[0].mxu0
        %629 = vmatprep.mubr.bf16.mxu0 %v388
        %630 = vmatmul.mubr.bf16.gmra.mrb[0].mxu0 %v387
        %v631 = vpop.f32.mrb[0].mxu0
        %v632 = vadd.f32 0.0, %v631
        %v633 = vpop.f32.mrb[0].mxu0
        %v634 = vpop.f32.mrb[0].mxu0
        %v635 = vadd.f32 0.0, %v634
        %v636 = vpop.f32.mrb[0].mxu0
        %637 = vmatprep.mubr.bf16.mxu0 %v390
        %638 = vmatmul.mubr.bf16.gmra.mrb[0].mxu0 %v389
        %v639 = vpop.f32.mrb[0].mxu0
        %v640 = vadd.f32 0.0, %v639
        %v641 = vpop.f32.mrb[0].mxu0
        %v642 = vpop.f32.mrb[0].mxu0
        %v643 = vadd.f32 0.0, %v642
        %v644 = vpop.f32.mrb[0].mxu0
        %645 = vmatprep.mubr.bf16.mxu0 %v392
        %646 = vmatmul.mubr.bf16.gmra.mrb[0].mxu0 %v391
        %v647 = vpop.f32.mrb[0].mxu0
        %v648 = vadd.f32 0.0, %v647
        %v649 = vpop.f32.mrb[0].mxu0
        %v650 = vpop.f32.mrb[0].mxu0
        %v651 = vadd.f32 0.0, %v650
        %v652 = vpop.f32.mrb[0].mxu0
        %653 = vmatprep.mubr.bf16.mxu0 %v394
        %654 = vmatmul.mubr.bf16.gmra.mrb[0].mxu0 %v393
        %v655 = vpop.f32.mrb[0].mxu0
        %v656 = vadd.f32 0.0, %v655
        %v657 = vpop.f32.mrb[0].mxu0
        %v658 = vpop.f32.mrb[0].mxu0
        %v659 = vadd.f32 0.0, %v658
        %v660 = vpop.f32.mrb[0].mxu0
        %661 = vmatprep.mubr.bf16.mxu0 %v396
        %662 = vmatmul.mubr.bf16.gmra.mrb[0].mxu0 %v395
        %v663 = vpop.f32.mrb[0].mxu0
        %v664 = vadd.f32 0.0, %v663
        %v665 = vpop.f32.mrb[0].mxu0
        %v666 = vpop.f32.mrb[0].mxu0
        %v667 = vadd.f32 0.0, %v666
        %v668 = vpop.f32.mrb[0].mxu0
        %669 = vdwg.mxu0
        %v702 = vunpack.c.l.b16 %v171
        %v703 = vunpack.c.h.b16 %v171
        %v704 = vunpack.c.l.b16 %v172
        %v705 = vunpack.c.h.b16 %v172
        %v706 = vunpack.c.l.b16 %v173
        %v707 = vunpack.c.h.b16 %v173
        %v708 = vunpack.c.l.b16 %v174
        %v709 = vunpack.c.h.b16 %v174
        %v710 = vunpack.c.l.b16 %v175
        %v711 = vunpack.c.h.b16 %v175
        %v712 = vunpack.c.l.b16 %v176
        %v713 = vunpack.c.h.b16 %v176
        %v714 = vunpack.c.l.b16 %v177
        %v715 = vunpack.c.h.b16 %v177
        %v716 = vunpack.c.l.b16 %v178
        %v717 = vunpack.c.h.b16 %v178
        %v718 = vunpack.c.l.b16 %v179
        %v719 = vunpack.c.h.b16 %v179
        %v720 = vunpack.c.l.b16 %v180
        %v721 = vunpack.c.h.b16 %v180
        %v722 = vunpack.c.l.b16 %v181
        %v723 = vunpack.c.h.b16 %v181
        %v724 = vunpack.c.l.b16 %v182
        %v725 = vunpack.c.h.b16 %v182
        %v726 = vunpack.c.l.b16 %v183
        %v727 = vunpack.c.h.b16 %v183
        %v728 = vunpack.c.l.b16 %v184
        %v729 = vunpack.c.h.b16 %v184
        %v730 = vunpack.c.l.b16 %v185
        %v731 = vunpack.c.h.b16 %v185
        %v732 = vunpack.c.l.b16 %v186
        %v733 = vunpack.c.h.b16 %v186
        %v734 = vunpack.c.l.b16 %v187
        %v735 = vunpack.c.h.b16 %v187
        %v736 = vunpack.c.l.b16 %v188
        %v737 = vunpack.c.h.b16 %v188
        %v738 = vunpack.c.l.b16 %v189
        %v739 = vunpack.c.h.b16 %v189
        %v740 = vunpack.c.l.b16 %v190
        %v741 = vunpack.c.h.b16 %v190
        %v742 = vunpack.c.l.b16 %v191
        %v743 = vunpack.c.h.b16 %v191
        %v744 = vunpack.c.l.b16 %v192
        %v745 = vunpack.c.h.b16 %v192
        %v746 = vunpack.c.l.b16 %v193
        %v747 = vunpack.c.h.b16 %v193
        %v748 = vunpack.c.l.b16 %v194
        %v749 = vunpack.c.h.b16 %v194
        %v750 = vunpack.c.l.b16 %v195
        %v751 = vunpack.c.h.b16 %v195
        %v752 = vunpack.c.l.b16 %v196
        %v753 = vunpack.c.h.b16 %v196
        %v754 = vunpack.c.l.b16 %v197
        %v755 = vunpack.c.h.b16 %v197
        %v756 = vunpack.c.l.b16 %v198
        %v757 = vunpack.c.h.b16 %v198
        %v758 = vunpack.c.l.b16 %v199
        %v759 = vunpack.c.h.b16 %v199
        %v760 = vunpack.c.l.b16 %v200
        %v761 = vunpack.c.h.b16 %v200
        %v762 = vunpack.c.l.b16 %v201
        %v763 = vunpack.c.h.b16 %v201
        %v764 = vunpack.c.l.b16 %v202
        %v765 = vunpack.c.h.b16 %v202
        %v766 = vpack.c.b16 %v704, %v702
        %v767 = vpack.c.b16 %v705, %v703
        %v768 = vpack.c.b16 %v708, %v706
        %v769 = vpack.c.b16 %v709, %v707
        %v770 = vpack.c.b16 %v712, %v710
        %v771 = vpack.c.b16 %v713, %v711
        %v772 = vpack.c.b16 %v716, %v714
        %v773 = vpack.c.b16 %v717, %v715
        %v774 = vpack.c.b16 %v720, %v718
        %v775 = vpack.c.b16 %v721, %v719
        %v776 = vpack.c.b16 %v724, %v722
        %v777 = vpack.c.b16 %v725, %v723
        %v778 = vpack.c.b16 %v728, %v726
        %v779 = vpack.c.b16 %v729, %v727
        %v780 = vpack.c.b16 %v732, %v730
        %v781 = vpack.c.b16 %v733, %v731
        %v782 = vpack.c.b16 %v736, %v734
        %v783 = vpack.c.b16 %v737, %v735
        %v784 = vpack.c.b16 %v740, %v738
        %v785 = vpack.c.b16 %v741, %v739
        %v786 = vpack.c.b16 %v744, %v742
        %v787 = vpack.c.b16 %v745, %v743
        %v788 = vpack.c.b16 %v748, %v746
        %v789 = vpack.c.b16 %v749, %v747
        %v790 = vpack.c.b16 %v752, %v750
        %v791 = vpack.c.b16 %v753, %v751
        %v792 = vpack.c.b16 %v756, %v754
        %v793 = vpack.c.b16 %v757, %v755
        %v794 = vpack.c.b16 %v760, %v758
        %v795 = vpack.c.b16 %v761, %v759
        %v796 = vpack.c.b16 %v764, %v762
        %v797 = vpack.c.b16 %v765, %v763
        %v846 = vunpack.c.l.b16 %v203
        %v847 = vunpack.c.h.b16 %v203
        %v848 = vunpack.c.l.b16 %v204
        %v849 = vunpack.c.h.b16 %v204
        %v850 = vunpack.c.l.b16 %v205
        %v851 = vunpack.c.h.b16 %v205
        %v852 = vunpack.c.l.b16 %v206
        %v853 = vunpack.c.h.b16 %v206
        %v854 = vunpack.c.l.b16 %v207
        %v855 = vunpack.c.h.b16 %v207
        %v856 = vunpack.c.l.b16 %v208
        %v857 = vunpack.c.h.b16 %v208
        %v858 = vunpack.c.l.b16 %v209
        %v859 = vunpack.c.h.b16 %v209
        %v860 = vunpack.c.l.b16 %v210
        %v861 = vunpack.c.h.b16 %v210
        %v862 = vunpack.c.l.b16 %v211
        %v863 = vunpack.c.h.b16 %v211
        %v864 = vunpack.c.l.b16 %v212
        %v865 = vunpack.c.h.b16 %v212
        %v866 = vunpack.c.l.b16 %v213
        %v867 = vunpack.c.h.b16 %v213
        %v868 = vunpack.c.l.b16 %v214
        %v869 = vunpack.c.h.b16 %v214
        %v870 = vunpack.c.l.b16 %v215
        %v871 = vunpack.c.h.b16 %v215
        %v872 = vunpack.c.l.b16 %v216
        %v873 = vunpack.c.h.b16 %v216
        %v874 = vunpack.c.l.b16 %v217
        %v875 = vunpack.c.h.b16 %v217
        %v876 = vunpack.c.l.b16 %v218
        %v877 = vunpack.c.h.b16 %v218
        %v878 = vpack.c.b16 %v848, %v846
        %v879 = vpack.c.b16 %v849, %v847
        %v880 = vpack.c.b16 %v852, %v850
        %v881 = vpack.c.b16 %v853, %v851
        %v882 = vpack.c.b16 %v856, %v854
        %v883 = vpack.c.b16 %v857, %v855
        %v884 = vpack.c.b16 %v860, %v858
        %v885 = vpack.c.b16 %v861, %v859
        %v886 = vpack.c.b16 %v864, %v862
        %v887 = vpack.c.b16 %v865, %v863
        %v888 = vpack.c.b16 %v868, %v866
        %v889 = vpack.c.b16 %v869, %v867
        %v890 = vpack.c.b16 %v872, %v870
        %v891 = vpack.c.b16 %v873, %v871
        %v892 = vpack.c.b16 %v876, %v874
        %v893 = vpack.c.b16 %v877, %v875
        %910 = vmatprep.subr.bf16.mxu0 %v879
        %911 = vmatpush1.bf16.xpose.msra.mxu0 %v878
        %912 = vmatprep.subr.bf16.mxu0 %v881
        %913 = vmatpush1.bf16.xpose.msra.mxu0 %v880
        %914 = vmatprep.subr.bf16.mxu0 %v883
        %915 = vmatpush1.bf16.xpose.msra.mxu0 %v882
        %916 = vmatprep.subr.bf16.mxu0 %v885
        %917 = vmatpush1.bf16.xpose.msra.mxu0 %v884
        %918 = vmatprep.subr.bf16.mxu0 %v887
        %919 = vmatpush1.bf16.xpose.msra.mxu0 %v886
        %920 = vmatprep.subr.bf16.mxu0 %v889
        %921 = vmatpush1.bf16.xpose.msra.mxu0 %v888
        %922 = vmatprep.subr.bf16.mxu0 %v891
        %923 = vmatpush1.bf16.xpose.msra.mxu0 %v890
        %924 = vmatprep.subr.bf16.mxu0 %v893
        %925 = vmatpush1.bf16.xpose.msra.mxu0 %v892
        %926 = vmatprep.subr.bf16.mxu0 0
        %927 = vmatpush1.bf16.xpose.msra.mxu0 0
        %928 = vmatprep.subr.bf16.mxu0 0
        %929 = vmatpush1.bf16.xpose.msra.mxu0 0
        %930 = vmatprep.subr.bf16.mxu0 0
        %931 = vmatpush1.bf16.xpose.msra.mxu0 0
        %932 = vmatprep.subr.bf16.mxu0 0
        %933 = vmatpush1.bf16.xpose.msra.mxu0 0
        %934 = vmatprep.subr.bf16.mxu0 0
        %935 = vmatpush1.bf16.xpose.msra.mxu0 0
        %936 = vmatprep.subr.bf16.mxu0 0
        %937 = vmatpush1.bf16.xpose.msra.mxu0 0
        %938 = vmatprep.subr.bf16.mxu0 0
        %939 = vmatpush1.bf16.xpose.msra.mxu0 0
        %940 = vmatprep.subr.bf16.mxu0 0
        %941 = vmatpush1.bf16.xpose.msra.mxu0 0
        %942 = vmatprep.mubr.bf16.mxu0 %v767
        %943 = vmatmul.mubr.bf16.gmra.mrb[0].mxu0 %v766
        %v944 = vpop.f32.mrb[0].mxu0
        %v945 = vadd.f32 %v544, %v944
        %v946 = vpop.f32.mrb[0].mxu0
        %v947 = vpop.f32.mrb[0].mxu0
        %v948 = vadd.f32 %v547, %v947
        %v949 = vpop.f32.mrb[0].mxu0
        %950 = vmatprep.mubr.bf16.mxu0 %v769
        %951 = vmatmul.mubr.bf16.gmra.mrb[0].mxu0 %v768
        %v952 = vpop.f32.mrb[0].mxu0
        %v953 = vadd.f32 %v552, %v952
        %v954 = vpop.f32.mrb[0].mxu0
        %v955 = vpop.f32.mrb[0].mxu0
        %v956 = vadd.f32 %v555, %v955
        %v957 = vpop.f32.mrb[0].mxu0
        %958 = vmatprep.mubr.bf16.mxu0 %v771
        %959 = vmatmul.mubr.bf16.gmra.mrb[0].mxu0 %v770
        %v960 = vpop.f32.mrb[0].mxu0
        %v961 = vadd.f32 %v560, %v960
        %v962 = vpop.f32.mrb[0].mxu0
        %v963 = vpop.f32.mrb[0].mxu0
        %v964 = vadd.f32 %v563, %v963
        %v965 = vpop.f32.mrb[0].mxu0
        %966 = vmatprep.mubr.bf16.mxu0 %v773
        %967 = vmatmul.mubr.bf16.gmra.mrb[0].mxu0 %v772
        %v968 = vpop.f32.mrb[0].mxu0
        %v969 = vadd.f32 %v568, %v968
        %v970 = vpop.f32.mrb[0].mxu0
        %v971 = vpop.f32.mrb[0].mxu0
        %v972 = vadd.f32 %v571, %v971
        %v973 = vpop.f32.mrb[0].mxu0
        %974 = vmatprep.mubr.bf16.mxu0 %v775
        %975 = vmatmul.mubr.bf16.gmra.mrb[0].mxu0 %v774
        %v976 = vpop.f32.mrb[0].mxu0
        %v977 = vadd.f32 %v576, %v976
        %v978 = vpop.f32.mrb[0].mxu0
        %v979 = vpop.f32.mrb[0].mxu0
        %v980 = vadd.f32 %v579, %v979
        %v981 = vpop.f32.mrb[0].mxu0
        %982 = vmatprep.mubr.bf16.mxu0 %v777
        %983 = vmatmul.mubr.bf16.gmra.mrb[0].mxu0 %v776
        %v984 = vpop.f32.mrb[0].mxu0
        %v985 = vadd.f32 %v584, %v984
        %v986 = vpop.f32.mrb[0].mxu0
        %v987 = vpop.f32.mrb[0].mxu0
        %v988 = vadd.f32 %v587, %v987
        %v989 = vpop.f32.mrb[0].mxu0
        %990 = vmatprep.mubr.bf16.mxu0 %v779
        %991 = vmatmul.mubr.bf16.gmra.mrb[0].mxu0 %v778
        %v992 = vpop.f32.mrb[0].mxu0
        %v993 = vadd.f32 %v592, %v992
        %v994 = vpop.f32.mrb[0].mxu0
        %v995 = vpop.f32.mrb[0].mxu0
        %v996 = vadd.f32 %v595, %v995
        %v997 = vpop.f32.mrb[0].mxu0
        %998 = vmatprep.mubr.bf16.mxu0 %v781
        %999 = vmatmul.mubr.bf16.gmra.mrb[0].mxu0 %v780
        %v1000 = vpop.f32.mrb[0].mxu0
        %v1001 = vadd.f32 %v600, %v1000
        %v1002 = vpop.f32.mrb[0].mxu0
        %v1003 = vpop.f32.mrb[0].mxu0
        %v1004 = vadd.f32 %v603, %v1003
        %v1005 = vpop.f32.mrb[0].mxu0
        %1006 = vmatprep.mubr.bf16.mxu0 %v783
        %1007 = vmatmul.mubr.bf16.gmra.mrb[0].mxu0 %v782
        %v1008 = vpop.f32.mrb[0].mxu0
        %v1009 = vadd.f32 %v608, %v1008
        %v1010 = vpop.f32.mrb[0].mxu0
        %v1011 = vpop.f32.mrb[0].mxu0
        %v1012 = vadd.f32 %v611, %v1011
        %v1013 = vpop.f32.mrb[0].mxu0
        %1014 = vmatprep.mubr.bf16.mxu0 %v785
        %1015 = vmatmul.mubr.bf16.gmra.mrb[0].mxu0 %v784
        %v1016 = vpop.f32.mrb[0].mxu0
        %v1017 = vadd.f32 %v616, %v1016
        %v1018 = vpop.f32.mrb[0].mxu0
        %v1019 = vpop.f32.mrb[0].mxu0
        %v1020 = vadd.f32 %v619, %v1019
        %v1021 = vpop.f32.mrb[0].mxu0
        %1022 = vmatprep.mubr.bf16.mxu0 %v787
        %1023 = vmatmul.mubr.bf16.gmra.mrb[0].mxu0 %v786
        %v1024 = vpop.f32.mrb[0].mxu0
        %v1025 = vadd.f32 %v624, %v1024
        %v1026 = vpop.f32.mrb[0].mxu0
        %v1027 = vpop.f32.mrb[0].mxu0
        %v1028 = vadd.f32 %v627, %v1027
        %v1029 = vpop.f32.mrb[0].mxu0
        %1030 = vmatprep.mubr.bf16.mxu0 %v789
        %1031 = vmatmul.mubr.bf16.gmra.mrb[0].mxu0 %v788
        %v1032 = vpop.f32.mrb[0].mxu0
        %v1033 = vadd.f32 %v632, %v1032
        %v1034 = vpop.f32.mrb[0].mxu0
        %v1035 = vpop.f32.mrb[0].mxu0
        %v1036 = vadd.f32 %v635, %v1035
        %v1037 = vpop.f32.mrb[0].mxu0
        %1038 = vmatprep.mubr.bf16.mxu0 %v791
        %1039 = vmatmul.mubr.bf16.gmra.mrb[0].mxu0 %v790
        %v1040 = vpop.f32.mrb[0].mxu0
        %v1041 = vadd.f32 %v640, %v1040
        %v1042 = vpop.f32.mrb[0].mxu0
        %v1043 = vpop.f32.mrb[0].mxu0
        %v1044 = vadd.f32 %v643, %v1043
        %v1045 = vpop.f32.mrb[0].mxu0
        %1046 = vmatprep.mubr.bf16.mxu0 %v793
        %1047 = vmatmul.mubr.bf16.gmra.mrb[0].mxu0 %v792
        %v1048 = vpop.f32.mrb[0].mxu0
        %v1049 = vadd.f32 %v648, %v1048
        %v1050 = vpop.f32.mrb[0].mxu0
        %v1051 = vpop.f32.mrb[0].mxu0
        %v1052 = vadd.f32 %v651, %v1051
        %v1053 = vpop.f32.mrb[0].mxu0
        %1054 = vmatprep.mubr.bf16.mxu0 %v795
        %1055 = vmatmul.mubr.bf16.gmra.mrb[0].mxu0 %v794
        %v1056 = vpop.f32.mrb[0].mxu0
        %v1057 = vadd.f32 %v656, %v1056
        %v1058 = vpop.f32.mrb[0].mxu0
        %v1059 = vpop.f32.mrb[0].mxu0
        %v1060 = vadd.f32 %v659, %v1059
        %v1061 = vpop.f32.mrb[0].mxu0
        %1062 = vmatprep.mubr.bf16.mxu0 %v797
        %1063 = vmatmul.mubr.bf16.gmra.mrb[0].mxu0 %v796
        %v1064 = vpop.f32.mrb[0].mxu0
        %v1065 = vadd.f32 %v664, %v1064
        %v1066 = vpop.f32.mrb[0].mxu0
        %v1067 = vpop.f32.mrb[0].mxu0
        %v1068 = vadd.f32 %v667, %v1067
        %v1069 = vpop.f32.mrb[0].mxu0
        %1070 = vdwg.mxu0
        %s1071 = scalar_lea.vmem %s1, 512
        %v1072 = vld [vmem:[%s1071] sm:$0xff]
        %v1073 = vld [vmem:[%s1071 + $0x8] sm:$0xff]
        %v1074 = vld [vmem:[%s1071 + $0x10] sm:$0xff]
        %v1075 = vld [vmem:[%s1071 + $0x18] sm:$0xff]
        %v1076 = vld [vmem:[%s1071 + $0x20] sm:$0xff]
        %v1077 = vld [vmem:[%s1071 + $0x28] sm:$0xff]
        %v1078 = vld [vmem:[%s1071 + $0x30] sm:$0xff]
        %v1079 = vld [vmem:[%s1071 + $0x38] sm:$0xff]
        %v1080 = vld [vmem:[%s1071 + $0x40] sm:$0xff]
        %v1081 = vld [vmem:[%s1071 + $0x48] sm:$0xff]
        %v1082 = vld [vmem:[%s1071 + $0x50] sm:$0xff]
        %v1083 = vld [vmem:[%s1071 + $0x58] sm:$0xff]
        %v1084 = vld [vmem:[%s1071 + $0x60] sm:$0xff]
        %v1085 = vld [vmem:[%s1071 + $0x68] sm:$0xff]
        %v1086 = vld [vmem:[%s1071 + $0x70] sm:$0xff]
        %v1087 = vld [vmem:[%s1071 + $0x78] sm:$0xff]
        %v1088 = vld [vmem:[%s1071 + $0x80] sm:$0xff]
        %v1089 = vld [vmem:[%s1071 + $0x88] sm:$0xff]
        %v1090 = vld [vmem:[%s1071 + $0x90] sm:$0xff]
        %v1091 = vld [vmem:[%s1071 + $0x98] sm:$0xff]
        %v1092 = vld [vmem:[%s1071 + $0xa0] sm:$0xff]
        %v1093 = vld [vmem:[%s1071 + $0xa8] sm:$0xff]
        %v1094 = vld [vmem:[%s1071 + $0xb0] sm:$0xff]
        %v1095 = vld [vmem:[%s1071 + $0xb8] sm:$0xff]
        %v1096 = vld [vmem:[%s1071 + $0xc0] sm:$0xff]
        %v1097 = vld [vmem:[%s1071 + $0xc8] sm:$0xff]
        %v1098 = vld [vmem:[%s1071 + $0xd0] sm:$0xff]
        %v1099 = vld [vmem:[%s1071 + $0xd8] sm:$0xff]
        %v1100 = vld [vmem:[%s1071 + $0xe0] sm:$0xff]
        %v1101 = vld [vmem:[%s1071 + $0xe8] sm:$0xff]
        %v1102 = vld [vmem:[%s1071 + $0xf0] sm:$0xff]
        %v1103 = vld [vmem:[%s1071 + $0xf8] sm:$0xff]
        %v1104 = vld [vmem:[%s169] sm:$0xff]
        %v1105 = vld [vmem:[%s169 + $0x8] sm:$0xff]
        %v1106 = vld [vmem:[%s169 + $0x10] sm:$0xff]
        %v1107 = vld [vmem:[%s169 + $0x18] sm:$0xff]
        %v1108 = vld [vmem:[%s169 + $0x20] sm:$0xff]
        %v1109 = vld [vmem:[%s169 + $0x28] sm:$0xff]
        %v1110 = vld [vmem:[%s169 + $0x30] sm:$0xff]
        %v1111 = vld [vmem:[%s169 + $0x38] sm:$0xff]
        %v1112 = vld [vmem:[%s169 + $0x40] sm:$0xff]
        %v1113 = vld [vmem:[%s169 + $0x48] sm:$0xff]
        %v1114 = vld [vmem:[%s169 + $0x50] sm:$0xff]
        %v1115 = vld [vmem:[%s169 + $0x58] sm:$0xff]
        %v1116 = vld [vmem:[%s169 + $0x60] sm:$0xff]
        %v1117 = vld [vmem:[%s169 + $0x68] sm:$0xff]
        %v1118 = vld [vmem:[%s169 + $0x70] sm:$0xff]
        %v1119 = vld [vmem:[%s169 + $0x78] sm:$0xff]
        %v1120 = vld [vmem:[%s169 + $0x80] sm:$0x11]
        %v1153 = vunpack.c.l.b16 %v1072
        %v1154 = vunpack.c.h.b16 %v1072
        %v1155 = vunpack.c.l.b16 %v1073
        %v1156 = vunpack.c.h.b16 %v1073
        %v1157 = vunpack.c.l.b16 %v1074
        %v1158 = vunpack.c.h.b16 %v1074
        %v1159 = vunpack.c.l.b16 %v1075
        %v1160 = vunpack.c.h.b16 %v1075
        %v1161 = vunpack.c.l.b16 %v1076
        %v1162 = vunpack.c.h.b16 %v1076
        %v1163 = vunpack.c.l.b16 %v1077
        %v1164 = vunpack.c.h.b16 %v1077
        %v1165 = vunpack.c.l.b16 %v1078
        %v1166 = vunpack.c.h.b16 %v1078
        %v1167 = vunpack.c.l.b16 %v1079
        %v1168 = vunpack.c.h.b16 %v1079
        %v1169 = vunpack.c.l.b16 %v1080
        %v1170 = vunpack.c.h.b16 %v1080
        %v1171 = vunpack.c.l.b16 %v1081
        %v1172 = vunpack.c.h.b16 %v1081
        %v1173 = vunpack.c.l.b16 %v1082
        %v1174 = vunpack.c.h.b16 %v1082
        %v1175 = vunpack.c.l.b16 %v1083
        %v1176 = vunpack.c.h.b16 %v1083
        %v1177 = vunpack.c.l.b16 %v1084
        %v1178 = vunpack.c.h.b16 %v1084
        %v1179 = vunpack.c.l.b16 %v1085
        %v1180 = vunpack.c.h.b16 %v1085
        %v1181 = vunpack.c.l.b16 %v1086
        %v1182 = vunpack.c.h.b16 %v1086
        %v1183 = vunpack.c.l.b16 %v1087
        %v1184 = vunpack.c.h.b16 %v1087
        %v1185 = vunpack.c.l.b16 %v1088
        %v1186 = vunpack.c.h.b16 %v1088
        %v1187 = vunpack.c.l.b16 %v1089
        %v1188 = vunpack.c.h.b16 %v1089
        %v1189 = vunpack.c.l.b16 %v1090
        %v1190 = vunpack.c.h.b16 %v1090
        %v1191 = vunpack.c.l.b16 %v1091
        %v1192 = vunpack.c.h.b16 %v1091
        %v1193 = vunpack.c.l.b16 %v1092
        %v1194 = vunpack.c.h.b16 %v1092
        %v1195 = vunpack.c.l.b16 %v1093
        %v1196 = vunpack.c.h.b16 %v1093
        %v1197 = vunpack.c.l.b16 %v1094
        %v1198 = vunpack.c.h.b16 %v1094
        %v1199 = vunpack.c.l.b16 %v1095
        %v1200 = vunpack.c.h.b16 %v1095
        %v1201 = vunpack.c.l.b16 %v1096
        %v1202 = vunpack.c.h.b16 %v1096
        %v1203 = vunpack.c.l.b16 %v1097
        %v1204 = vunpack.c.h.b16 %v1097
        %v1205 = vunpack.c.l.b16 %v1098
        %v1206 = vunpack.c.h.b16 %v1098
        %v1207 = vunpack.c.l.b16 %v1099
        %v1208 = vunpack.c.h.b16 %v1099
        %v1209 = vunpack.c.l.b16 %v1100
        %v1210 = vunpack.c.h.b16 %v1100
        %v1211 = vunpack.c.l.b16 %v1101
        %v1212 = vunpack.c.h.b16 %v1101
        %v1213 = vunpack.c.l.b16 %v1102
        %v1214 = vunpack.c.h.b16 %v1102
        %v1215 = vunpack.c.l.b16 %v1103
        %v1216 = vunpack.c.h.b16 %v1103
        %v1217 = vpack.c.b16 %v1155, %v1153
        %v1218 = vpack.c.b16 %v1156, %v1154
        %v1219 = vpack.c.b16 %v1159, %v1157
        %v1220 = vpack.c.b16 %v1160, %v1158
        %v1221 = vpack.c.b16 %v1163, %v1161
        %v1222 = vpack.c.b16 %v1164, %v1162
        %v1223 = vpack.c.b16 %v1167, %v1165
        %v1224 = vpack.c.b16 %v1168, %v1166
        %v1225 = vpack.c.b16 %v1171, %v1169
        %v1226 = vpack.c.b16 %v1172, %v1170
        %v1227 = vpack.c.b16 %v1175, %v1173
        %v1228 = vpack.c.b16 %v1176, %v1174
        %v1229 = vpack.c.b16 %v1179, %v1177
        %v1230 = vpack.c.b16 %v1180, %v1178
        %v1231 = vpack.c.b16 %v1183, %v1181
        %v1232 = vpack.c.b16 %v1184, %v1182
        %v1233 = vpack.c.b16 %v1187, %v1185
        %v1234 = vpack.c.b16 %v1188, %v1186
        %v1235 = vpack.c.b16 %v1191, %v1189
        %v1236 = vpack.c.b16 %v1192, %v1190
        %v1237 = vpack.c.b16 %v1195, %v1193
        %v1238 = vpack.c.b16 %v1196, %v1194
        %v1239 = vpack.c.b16 %v1199, %v1197
        %v1240 = vpack.c.b16 %v1200, %v1198
        %v1241 = vpack.c.b16 %v1203, %v1201
        %v1242 = vpack.c.b16 %v1204, %v1202
        %v1243 = vpack.c.b16 %v1207, %v1205
        %v1244 = vpack.c.b16 %v1208, %v1206
        %v1245 = vpack.c.b16 %v1211, %v1209
        %v1246 = vpack.c.b16 %v1212, %v1210
        %v1247 = vpack.c.b16 %v1215, %v1213
        %v1248 = vpack.c.b16 %v1216, %v1214
        %v1298 = vunpack.c.l.b16 %v1104
        %v1299 = vunpack.c.h.b16 %v1104
        %v1300 = vunpack.c.l.b16 %v1105
        %v1301 = vunpack.c.h.b16 %v1105
        %v1302 = vunpack.c.l.b16 %v1106
        %v1303 = vunpack.c.h.b16 %v1106
        %v1304 = vunpack.c.l.b16 %v1107
        %v1305 = vunpack.c.h.b16 %v1107
        %v1306 = vunpack.c.l.b16 %v1108
        %v1307 = vunpack.c.h.b16 %v1108
        %v1308 = vunpack.c.l.b16 %v1109
        %v1309 = vunpack.c.h.b16 %v1109
        %v1310 = vunpack.c.l.b16 %v1110
        %v1311 = vunpack.c.h.b16 %v1110
        %v1312 = vunpack.c.l.b16 %v1111
        %v1313 = vunpack.c.h.b16 %v1111
        %v1314 = vunpack.c.l.b16 %v1112
        %v1315 = vunpack.c.h.b16 %v1112
        %v1316 = vunpack.c.l.b16 %v1113
        %v1317 = vunpack.c.h.b16 %v1113
        %v1318 = vunpack.c.l.b16 %v1114
        %v1319 = vunpack.c.h.b16 %v1114
        %v1320 = vunpack.c.l.b16 %v1115
        %v1321 = vunpack.c.h.b16 %v1115
        %v1322 = vunpack.c.l.b16 %v1116
        %v1323 = vunpack.c.h.b16 %v1116
        %v1324 = vunpack.c.l.b16 %v1117
        %v1325 = vunpack.c.h.b16 %v1117
        %v1326 = vunpack.c.l.b16 %v1118
        %v1327 = vunpack.c.h.b16 %v1118
        %v1328 = vunpack.c.l.b16 %v1119
        %v1329 = vunpack.c.h.b16 %v1119
        %v1330 = vunpack.c.l.b16 %v1120
        %v1331 = vunpack.c.h.b16 %v1120
        %v1332 = vpack.c.b16 %v1300, %v1298
        %v1333 = vpack.c.b16 %v1301, %v1299
        %v1334 = vpack.c.b16 %v1304, %v1302
        %v1335 = vpack.c.b16 %v1305, %v1303
        %v1336 = vpack.c.b16 %v1308, %v1306
        %v1337 = vpack.c.b16 %v1309, %v1307
        %v1338 = vpack.c.b16 %v1312, %v1310
        %v1339 = vpack.c.b16 %v1313, %v1311
        %v1340 = vpack.c.b16 %v1316, %v1314
        %v1341 = vpack.c.b16 %v1317, %v1315
        %v1342 = vpack.c.b16 %v1320, %v1318
        %v1343 = vpack.c.b16 %v1321, %v1319
        %v1344 = vpack.c.b16 %v1324, %v1322
        %v1345 = vpack.c.b16 %v1325, %v1323
        %v1346 = vpack.c.b16 %v1328, %v1326
        %v1347 = vpack.c.b16 %v1329, %v1327
        %v1348 = vpack.c.b16 %v1330, %v1330
        %v1349 = vpack.c.b16 %v1331, %v1331
        %vm1350 = vsmask.f32 7424
        %v1352 = vshrl.u32 %v1332, 16
        %v1354 = vshll.u32 %v1332, 16
        %v1356 = vrot.slane %v1354, 1
        %v1357 = vor.u32 %v1352, %v1356
        %v1359 = vshll.u32 %v1334, 16
        %v1361 = vrot.slane %v1359, 1
        %v1362 = vsel %vm1350, %v1357, %v1361
        %v1364 = vshrl.u32 %v1333, 16
        %v1366 = vshll.u32 %v1333, 16
        %v1368 = vrot.slane %v1366, 1
        %v1369 = vor.u32 %v1364, %v1368
        %v1371 = vshll.u32 %v1335, 16
        %v1373 = vrot.slane %v1371, 1
        %v1374 = vsel %vm1350, %v1369, %v1373
        %v1375 = vshrl.u32 %v1334, 16
        %v1377 = vor.u32 %v1375, %v1361
        %v1379 = vshll.u32 %v1336, 16
        %v1381 = vrot.slane %v1379, 1
        %v1382 = vsel %vm1350, %v1377, %v1381
        %v1383 = vshrl.u32 %v1335, 16
        %v1385 = vor.u32 %v1383, %v1373
        %v1387 = vshll.u32 %v1337, 16
        %v1389 = vrot.slane %v1387, 1
        %v1390 = vsel %vm1350, %v1385, %v1389
        %v1391 = vshrl.u32 %v1336, 16
        %v1393 = vor.u32 %v1391, %v1381
        %v1395 = vshll.u32 %v1338, 16
        %v1397 = vrot.slane %v1395, 1
        %v1398 = vsel %vm1350, %v1393, %v1397
        %v1399 = vshrl.u32 %v1337, 16
        %v1401 = vor.u32 %v1399, %v1389
        %v1403 = vshll.u32 %v1339, 16
        %v1405 = vrot.slane %v1403, 1
        %v1406 = vsel %vm1350, %v1401, %v1405
        %v1407 = vshrl.u32 %v1338, 16
        %v1409 = vor.u32 %v1407, %v1397
        %v1411 = vshll.u32 %v1340, 16
        %v1413 = vrot.slane %v1411, 1
        %v1414 = vsel %vm1350, %v1409, %v1413
        %v1415 = vshrl.u32 %v1339, 16
        %v1417 = vor.u32 %v1415, %v1405
        %v1419 = vshll.u32 %v1341, 16
        %v1421 = vrot.slane %v1419, 1
        %v1422 = vsel %vm1350, %v1417, %v1421
        %v1423 = vshrl.u32 %v1340, 16
        %v1425 = vor.u32 %v1423, %v1413
        %v1427 = vshll.u32 %v1342, 16
        %v1429 = vrot.slane %v1427, 1
        %v1430 = vsel %vm1350, %v1425, %v1429
        %v1431 = vshrl.u32 %v1341, 16
        %v1433 = vor.u32 %v1431, %v1421
        %v1435 = vshll.u32 %v1343, 16
        %v1437 = vrot.slane %v1435, 1
        %v1438 = vsel %vm1350, %v1433, %v1437
        %v1439 = vshrl.u32 %v1342, 16
        %v1441 = vor.u32 %v1439, %v1429
        %v1443 = vshll.u32 %v1344, 16
        %v1445 = vrot.slane %v1443, 1
        %v1446 = vsel %vm1350, %v1441, %v1445
        %v1447 = vshrl.u32 %v1343, 16
        %v1449 = vor.u32 %v1447, %v1437
        %v1451 = vshll.u32 %v1345, 16
        %v1453 = vrot.slane %v1451, 1
        %v1454 = vsel %vm1350, %v1449, %v1453
        %v1455 = vshrl.u32 %v1344, 16
        %v1457 = vor.u32 %v1455, %v1445
        %v1459 = vshll.u32 %v1346, 16
        %v1461 = vrot.slane %v1459, 1
        %v1462 = vsel %vm1350, %v1457, %v1461
        %v1463 = vshrl.u32 %v1345, 16
        %v1465 = vor.u32 %v1463, %v1453
        %v1467 = vshll.u32 %v1347, 16
        %v1469 = vrot.slane %v1467, 1
        %v1470 = vsel %vm1350, %v1465, %v1469
        %v1471 = vshrl.u32 %v1346, 16
        %v1473 = vor.u32 %v1471, %v1461
        %v1475 = vshll.u32 %v1348, 16
        %v1477 = vrot.slane %v1475, 1
        %v1478 = vsel %vm1350, %v1473, %v1477
        %v1479 = vshrl.u32 %v1347, 16
        %v1481 = vor.u32 %v1479, %v1469
        %v1483 = vshll.u32 %v1349, 16
        %v1485 = vrot.slane %v1483, 1
        %v1486 = vsel %vm1350, %v1481, %v1485
        %1503 = vmatprep.subr.bf16.mxu0 %v1374
        %1504 = vmatpush1.bf16.xpose.msra.mxu0 %v1362
        %1505 = vmatprep.subr.bf16.mxu0 %v1390
        %1506 = vmatpush1.bf16.xpose.msra.mxu0 %v1382
        %1507 = vmatprep.subr.bf16.mxu0 %v1406
        %1508 = vmatpush1.bf16.xpose.msra.mxu0 %v1398
        %1509 = vmatprep.subr.bf16.mxu0 %v1422
        %1510 = vmatpush1.bf16.xpose.msra.mxu0 %v1414
        %1511 = vmatprep.subr.bf16.mxu0 %v1438
        %1512 = vmatpush1.bf16.xpose.msra.mxu0 %v1430
        %1513 = vmatprep.subr.bf16.mxu0 %v1454
        %1514 = vmatpush1.bf16.xpose.msra.mxu0 %v1446
        %1515 = vmatprep.subr.bf16.mxu0 %v1470
        %1516 = vmatpush1.bf16.xpose.msra.mxu0 %v1462
        %1517 = vmatprep.subr.bf16.mxu0 %v1486
        %1518 = vmatpush1.bf16.xpose.msra.mxu0 %v1478
        %1519 = vmatprep.subr.bf16.mxu0 0
        %1520 = vmatpush1.bf16.xpose.msra.mxu0 0
        %1521 = vmatprep.subr.bf16.mxu0 0
        %1522 = vmatpush1.bf16.xpose.msra.mxu0 0
        %1523 = vmatprep.subr.bf16.mxu0 0
        %1524 = vmatpush1.bf16.xpose.msra.mxu0 0
        %1525 = vmatprep.subr.bf16.mxu0 0
        %1526 = vmatpush1.bf16.xpose.msra.mxu0 0
        %1527 = vmatprep.subr.bf16.mxu0 0
        %1528 = vmatpush1.bf16.xpose.msra.mxu0 0
        %1529 = vmatprep.subr.bf16.mxu0 0
        %1530 = vmatpush1.bf16.xpose.msra.mxu0 0
        %1531 = vmatprep.subr.bf16.mxu0 0
        %1532 = vmatpush1.bf16.xpose.msra.mxu0 0
        %1533 = vmatprep.subr.bf16.mxu0 0
        %1534 = vmatpush1.bf16.xpose.msra.mxu0 0
        %1535 = vmatprep.mubr.bf16.mxu0 %v1218
        %1536 = vmatmul.mubr.bf16.gmra.mrb[0].mxu0 %v1217
        %v1537 = vpop.f32.mrb[0].mxu0
        %v1538 = vadd.f32 0.0, %v1537
        %v1539 = vpop.f32.mrb[0].mxu0
        %v1540 = vpop.f32.mrb[0].mxu0
        %v1541 = vadd.f32 0.0, %v1540
        %v1542 = vpop.f32.mrb[0].mxu0
        %1543 = vmatprep.mubr.bf16.mxu0 %v1220
        %1544 = vmatmul.mubr.bf16.gmra.mrb[0].mxu0 %v1219
        %v1545 = vpop.f32.mrb[0].mxu0
        %v1546 = vadd.f32 0.0, %v1545
        %v1547 = vpop.f32.mrb[0].mxu0
        %v1548 = vpop.f32.mrb[0].mxu0
        %v1549 = vadd.f32 0.0, %v1548
        %v1550 = vpop.f32.mrb[0].mxu0
        %1551 = vmatprep.mubr.bf16.mxu0 %v1222
        %1552 = vmatmul.mubr.bf16.gmra.mrb[0].mxu0 %v1221
        %v1553 = vpop.f32.mrb[0].mxu0
        %v1554 = vadd.f32 0.0, %v1553
        %v1555 = vpop.f32.mrb[0].mxu0
        %v1556 = vpop.f32.mrb[0].mxu0
        %v1557 = vadd.f32 0.0, %v1556
        %v1558 = vpop.f32.mrb[0].mxu0
        %1559 = vmatprep.mubr.bf16.mxu0 %v1224
        %1560 = vmatmul.mubr.bf16.gmra.mrb[0].mxu0 %v1223
        %v1561 = vpop.f32.mrb[0].mxu0
        %v1562 = vadd.f32 0.0, %v1561
        %v1563 = vpop.f32.mrb[0].mxu0
        %v1564 = vpop.f32.mrb[0].mxu0
        %v1565 = vadd.f32 0.0, %v1564
        %v1566 = vpop.f32.mrb[0].mxu0
        %1567 = vmatprep.mubr.bf16.mxu0 %v1226
        %1568 = vmatmul.mubr.bf16.gmra.mrb[0].mxu0 %v1225
        %v1569 = vpop.f32.mrb[0].mxu0
        %v1570 = vadd.f32 0.0, %v1569
        %v1571 = vpop.f32.mrb[0].mxu0
        %v1572 = vpop.f32.mrb[0].mxu0
        %v1573 = vadd.f32 0.0, %v1572
        %v1574 = vpop.f32.mrb[0].mxu0
        %1575 = vmatprep.mubr.bf16.mxu0 %v1228
        %1576 = vmatmul.mubr.bf16.gmra.mrb[0].mxu0 %v1227
        %v1577 = vpop.f32.mrb[0].mxu0
        %v1578 = vadd.f32 0.0, %v1577
        %v1579 = vpop.f32.mrb[0].mxu0
        %v1580 = vpop.f32.mrb[0].mxu0
        %v1581 = vadd.f32 0.0, %v1580
        %v1582 = vpop.f32.mrb[0].mxu0
        %1583 = vmatprep.mubr.bf16.mxu0 %v1230
        %1584 = vmatmul.mubr.bf16.gmra.mrb[0].mxu0 %v1229
        %v1585 = vpop.f32.mrb[0].mxu0
        %v1586 = vadd.f32 0.0, %v1585
        %v1587 = vpop.f32.mrb[0].mxu0
        %v1588 = vpop.f32.mrb[0].mxu0
        %v1589 = vadd.f32 0.0, %v1588
        %v1590 = vpop.f32.mrb[0].mxu0
        %1591 = vmatprep.mubr.bf16.mxu0 %v1232
        %1592 = vmatmul.mubr.bf16.gmra.mrb[0].mxu0 %v1231
        %v1593 = vpop.f32.mrb[0].mxu0
        %v1594 = vadd.f32 0.0, %v1593
        %v1595 = vpop.f32.mrb[0].mxu0
        %v1596 = vpop.f32.mrb[0].mxu0
        %v1597 = vadd.f32 0.0, %v1596
        %v1598 = vpop.f32.mrb[0].mxu0
        %1599 = vmatprep.mubr.bf16.mxu0 %v1234
        %1600 = vmatmul.mubr.bf16.gmra.mrb[0].mxu0 %v1233
        %v1601 = vpop.f32.mrb[0].mxu0
        %v1602 = vadd.f32 0.0, %v1601
        %v1603 = vpop.f32.mrb[0].mxu0
        %v1604 = vpop.f32.mrb[0].mxu0
        %v1605 = vadd.f32 0.0, %v1604
        %v1606 = vpop.f32.mrb[0].mxu0
        %1607 = vmatprep.mubr.bf16.mxu0 %v1236
        %1608 = vmatmul.mubr.bf16.gmra.mrb[0].mxu0 %v1235
        %v1609 = vpop.f32.mrb[0].mxu0
        %v1610 = vadd.f32 0.0, %v1609
        %v1611 = vpop.f32.mrb[0].mxu0
        %v1612 = vpop.f32.mrb[0].mxu0
        %v1613 = vadd.f32 0.0, %v1612
        %v1614 = vpop.f32.mrb[0].mxu0
        %1615 = vmatprep.mubr.bf16.mxu0 %v1238
        %1616 = vmatmul.mubr.bf16.gmra.mrb[0].mxu0 %v1237
        %v1617 = vpop.f32.mrb[0].mxu0
        %v1618 = vadd.f32 0.0, %v1617
        %v1619 = vpop.f32.mrb[0].mxu0
        %v1620 = vpop.f32.mrb[0].mxu0
        %v1621 = vadd.f32 0.0, %v1620
        %v1622 = vpop.f32.mrb[0].mxu0
        %1623 = vmatprep.mubr.bf16.mxu0 %v1240
        %1624 = vmatmul.mubr.bf16.gmra.mrb[0].mxu0 %v1239
        %v1625 = vpop.f32.mrb[0].mxu0
        %v1626 = vadd.f32 0.0, %v1625
        %v1627 = vpop.f32.mrb[0].mxu0
        %v1628 = vpop.f32.mrb[0].mxu0
        %v1629 = vadd.f32 0.0, %v1628
        %v1630 = vpop.f32.mrb[0].mxu0
        %1631 = vmatprep.mubr.bf16.mxu0 %v1242
        %1632 = vmatmul.mubr.bf16.gmra.mrb[0].mxu0 %v1241
        %v1633 = vpop.f32.mrb[0].mxu0
        %v1634 = vadd.f32 0.0, %v1633
        %v1635 = vpop.f32.mrb[0].mxu0
        %v1636 = vpop.f32.mrb[0].mxu0
        %v1637 = vadd.f32 0.0, %v1636
        %v1638 = vpop.f32.mrb[0].mxu0
        %1639 = vmatprep.mubr.bf16.mxu0 %v1244
        %1640 = vmatmul.mubr.bf16.gmra.mrb[0].mxu0 %v1243
        %v1641 = vpop.f32.mrb[0].mxu0
        %v1642 = vadd.f32 0.0, %v1641
        %v1643 = vpop.f32.mrb[0].mxu0
        %v1644 = vpop.f32.mrb[0].mxu0
        %v1645 = vadd.f32 0.0, %v1644
        %v1646 = vpop.f32.mrb[0].mxu0
        %1647 = vmatprep.mubr.bf16.mxu0 %v1246
        %1648 = vmatmul.mubr.bf16.gmra.mrb[0].mxu0 %v1245
        %v1649 = vpop.f32.mrb[0].mxu0
        %v1650 = vadd.f32 0.0, %v1649
        %v1651 = vpop.f32.mrb[0].mxu0
        %v1652 = vpop.f32.mrb[0].mxu0
        %v1653 = vadd.f32 0.0, %v1652
        %v1654 = vpop.f32.mrb[0].mxu0
        %1655 = vmatprep.mubr.bf16.mxu0 %v1248
        %1656 = vmatmul.mubr.bf16.gmra.mrb[0].mxu0 %v1247
        %v1657 = vpop.f32.mrb[0].mxu0
        %v1658 = vadd.f32 0.0, %v1657
        %v1659 = vpop.f32.mrb[0].mxu0
        %v1660 = vpop.f32.mrb[0].mxu0
        %v1661 = vadd.f32 0.0, %v1660
        %v1662 = vpop.f32.mrb[0].mxu0
        %1663 = vdwg.mxu0
        %v1664 = vadd.f32 %v945, %v1538
        %v1665 = vadd.f32 %v948, %v1541
        %v1666 = vadd.f32 %v953, %v1546
        %v1667 = vadd.f32 %v956, %v1549
        %v1668 = vadd.f32 %v961, %v1554
        %v1669 = vadd.f32 %v964, %v1557
        %v1670 = vadd.f32 %v969, %v1562
        %v1671 = vadd.f32 %v972, %v1565
        %v1672 = vadd.f32 %v977, %v1570
        %v1673 = vadd.f32 %v980, %v1573
        %v1674 = vadd.f32 %v985, %v1578
        %v1675 = vadd.f32 %v988, %v1581
        %v1676 = vadd.f32 %v993, %v1586
        %v1677 = vadd.f32 %v996, %v1589
        %v1678 = vadd.f32 %v1001, %v1594
        %v1679 = vadd.f32 %v1004, %v1597
        %v1680 = vadd.f32 %v1009, %v1602
        %v1681 = vadd.f32 %v1012, %v1605
        %v1682 = vadd.f32 %v1017, %v1610
        %v1683 = vadd.f32 %v1020, %v1613
        %v1684 = vadd.f32 %v1025, %v1618
        %v1685 = vadd.f32 %v1028, %v1621
        %v1686 = vadd.f32 %v1033, %v1626
        %v1687 = vadd.f32 %v1036, %v1629
        %v1688 = vadd.f32 %v1041, %v1634
        %v1689 = vadd.f32 %v1044, %v1637
        %v1690 = vadd.f32 %v1049, %v1642
        %v1691 = vadd.f32 %v1052, %v1645
        %v1692 = vadd.f32 %v1057, %v1650
        %v1693 = vadd.f32 %v1060, %v1653
        %v1694 = vadd.f32 %v1065, %v1658
        %v1695 = vadd.f32 %v1068, %v1661
        %s1696 = scalar_lea.vmem %s1, 768
        %v1697 = vld [vmem:[%s1696] sm:$0xff]
        %v1698 = vld [vmem:[%s1696 + $0x8] sm:$0xff]
        %v1699 = vld [vmem:[%s1696 + $0x10] sm:$0xff]
        %v1700 = vld [vmem:[%s1696 + $0x18] sm:$0xff]
        %v1701 = vld [vmem:[%s1696 + $0x20] sm:$0xff]
        %v1702 = vld [vmem:[%s1696 + $0x28] sm:$0xff]
        %v1703 = vld [vmem:[%s1696 + $0x30] sm:$0xff]
        %v1704 = vld [vmem:[%s1696 + $0x38] sm:$0xff]
        %v1705 = vld [vmem:[%s1696 + $0x40] sm:$0xff]
        %v1706 = vld [vmem:[%s1696 + $0x48] sm:$0xff]
        %v1707 = vld [vmem:[%s1696 + $0x50] sm:$0xff]
        %v1708 = vld [vmem:[%s1696 + $0x58] sm:$0xff]
        %v1709 = vld [vmem:[%s1696 + $0x60] sm:$0xff]
        %v1710 = vld [vmem:[%s1696 + $0x68] sm:$0xff]
        %v1711 = vld [vmem:[%s1696 + $0x70] sm:$0xff]
        %v1712 = vld [vmem:[%s1696 + $0x78] sm:$0xff]
        %v1713 = vld [vmem:[%s1696 + $0x80] sm:$0xff]
        %v1714 = vld [vmem:[%s1696 + $0x88] sm:$0xff]
        %v1715 = vld [vmem:[%s1696 + $0x90] sm:$0xff]
        %v1716 = vld [vmem:[%s1696 + $0x98] sm:$0xff]
        %v1717 = vld [vmem:[%s1696 + $0xa0] sm:$0xff]
        %v1718 = vld [vmem:[%s1696 + $0xa8] sm:$0xff]
        %v1719 = vld [vmem:[%s1696 + $0xb0] sm:$0xff]
        %v1720 = vld [vmem:[%s1696 + $0xb8] sm:$0xff]
        %v1721 = vld [vmem:[%s1696 + $0xc0] sm:$0xff]
        %v1722 = vld [vmem:[%s1696 + $0xc8] sm:$0xff]
        %v1723 = vld [vmem:[%s1696 + $0xd0] sm:$0xff]
        %v1724 = vld [vmem:[%s1696 + $0xd8] sm:$0xff]
        %v1725 = vld [vmem:[%s1696 + $0xe0] sm:$0xff]
        %v1726 = vld [vmem:[%s1696 + $0xe8] sm:$0xff]
        %v1727 = vld [vmem:[%s1696 + $0xf0] sm:$0xff]
        %v1728 = vld [vmem:[%s1696 + $0xf8] sm:$0xff]
        %v1729 = vld [vmem:[%s252] sm:$0xff]
        %v1730 = vld [vmem:[%s252 + $0x8] sm:$0xff]
        %v1731 = vld [vmem:[%s252 + $0x10] sm:$0xff]
        %v1732 = vld [vmem:[%s252 + $0x18] sm:$0xff]
        %v1733 = vld [vmem:[%s252 + $0x20] sm:$0xff]
        %v1734 = vld [vmem:[%s252 + $0x28] sm:$0xff]
        %v1735 = vld [vmem:[%s252 + $0x30] sm:$0xff]
        %v1736 = vld [vmem:[%s252 + $0x38] sm:$0xff]
        %v1737 = vld [vmem:[%s252 + $0x40] sm:$0xff]
        %v1738 = vld [vmem:[%s252 + $0x48] sm:$0xff]
        %v1739 = vld [vmem:[%s252 + $0x50] sm:$0xff]
        %v1740 = vld [vmem:[%s252 + $0x58] sm:$0xff]
        %v1741 = vld [vmem:[%s252 + $0x60] sm:$0xff]
        %v1742 = vld [vmem:[%s252 + $0x68] sm:$0xff]
        %v1743 = vld [vmem:[%s252 + $0x70] sm:$0xff]
        %v1744 = vld [vmem:[%s252 + $0x78] sm:$0xff]
        %v1745 = vld [vmem:[%s252 + $0x80] sm:$0x11]
        %v1778 = vunpack.c.l.b16 %v1697
        %v1779 = vunpack.c.h.b16 %v1697
        %v1780 = vunpack.c.l.b16 %v1698
        %v1781 = vunpack.c.h.b16 %v1698
        %v1782 = vunpack.c.l.b16 %v1699
        %v1783 = vunpack.c.h.b16 %v1699
        %v1784 = vunpack.c.l.b16 %v1700
        %v1785 = vunpack.c.h.b16 %v1700
        %v1786 = vunpack.c.l.b16 %v1701
        %v1787 = vunpack.c.h.b16 %v1701
        %v1788 = vunpack.c.l.b16 %v1702
        %v1789 = vunpack.c.h.b16 %v1702
        %v1790 = vunpack.c.l.b16 %v1703
        %v1791 = vunpack.c.h.b16 %v1703
        %v1792 = vunpack.c.l.b16 %v1704
        %v1793 = vunpack.c.h.b16 %v1704
        %v1794 = vunpack.c.l.b16 %v1705
        %v1795 = vunpack.c.h.b16 %v1705
        %v1796 = vunpack.c.l.b16 %v1706
        %v1797 = vunpack.c.h.b16 %v1706
        %v1798 = vunpack.c.l.b16 %v1707
        %v1799 = vunpack.c.h.b16 %v1707
        %v1800 = vunpack.c.l.b16 %v1708
        %v1801 = vunpack.c.h.b16 %v1708
        %v1802 = vunpack.c.l.b16 %v1709
        %v1803 = vunpack.c.h.b16 %v1709
        %v1804 = vunpack.c.l.b16 %v1710
        %v1805 = vunpack.c.h.b16 %v1710
        %v1806 = vunpack.c.l.b16 %v1711
        %v1807 = vunpack.c.h.b16 %v1711
        %v1808 = vunpack.c.l.b16 %v1712
        %v1809 = vunpack.c.h.b16 %v1712
        %v1810 = vunpack.c.l.b16 %v1713
        %v1811 = vunpack.c.h.b16 %v1713
        %v1812 = vunpack.c.l.b16 %v1714
        %v1813 = vunpack.c.h.b16 %v1714
        %v1814 = vunpack.c.l.b16 %v1715
        %v1815 = vunpack.c.h.b16 %v1715
        %v1816 = vunpack.c.l.b16 %v1716
        %v1817 = vunpack.c.h.b16 %v1716
        %v1818 = vunpack.c.l.b16 %v1717
        %v1819 = vunpack.c.h.b16 %v1717
        %v1820 = vunpack.c.l.b16 %v1718
        %v1821 = vunpack.c.h.b16 %v1718
        %v1822 = vunpack.c.l.b16 %v1719
        %v1823 = vunpack.c.h.b16 %v1719
        %v1824 = vunpack.c.l.b16 %v1720
        %v1825 = vunpack.c.h.b16 %v1720
        %v1826 = vunpack.c.l.b16 %v1721
        %v1827 = vunpack.c.h.b16 %v1721
        %v1828 = vunpack.c.l.b16 %v1722
        %v1829 = vunpack.c.h.b16 %v1722
        %v1830 = vunpack.c.l.b16 %v1723
        %v1831 = vunpack.c.h.b16 %v1723
        %v1832 = vunpack.c.l.b16 %v1724
        %v1833 = vunpack.c.h.b16 %v1724
        %v1834 = vunpack.c.l.b16 %v1725
        %v1835 = vunpack.c.h.b16 %v1725
        %v1836 = vunpack.c.l.b16 %v1726
        %v1837 = vunpack.c.h.b16 %v1726
        %v1838 = vunpack.c.l.b16 %v1727
        %v1839 = vunpack.c.h.b16 %v1727
        %v1840 = vunpack.c.l.b16 %v1728
        %v1841 = vunpack.c.h.b16 %v1728
        %v1842 = vpack.c.b16 %v1780, %v1778
        %v1843 = vpack.c.b16 %v1781, %v1779
        %v1844 = vpack.c.b16 %v1784, %v1782
        %v1845 = vpack.c.b16 %v1785, %v1783
        %v1846 = vpack.c.b16 %v1788, %v1786
        %v1847 = vpack.c.b16 %v1789, %v1787
        %v1848 = vpack.c.b16 %v1792, %v1790
        %v1849 = vpack.c.b16 %v1793, %v1791
        %v1850 = vpack.c.b16 %v1796, %v1794
        %v1851 = vpack.c.b16 %v1797, %v1795
        %v1852 = vpack.c.b16 %v1800, %v1798
        %v1853 = vpack.c.b16 %v1801, %v1799
        %v1854 = vpack.c.b16 %v1804, %v1802
        %v1855 = vpack.c.b16 %v1805, %v1803
        %v1856 = vpack.c.b16 %v1808, %v1806
        %v1857 = vpack.c.b16 %v1809, %v1807
        %v1858 = vpack.c.b16 %v1812, %v1810
        %v1859 = vpack.c.b16 %v1813, %v1811
        %v1860 = vpack.c.b16 %v1816, %v1814
        %v1861 = vpack.c.b16 %v1817, %v1815
        %v1862 = vpack.c.b16 %v1820, %v1818
        %v1863 = vpack.c.b16 %v1821, %v1819
        %v1864 = vpack.c.b16 %v1824, %v1822
        %v1865 = vpack.c.b16 %v1825, %v1823
        %v1866 = vpack.c.b16 %v1828, %v1826
        %v1867 = vpack.c.b16 %v1829, %v1827
        %v1868 = vpack.c.b16 %v1832, %v1830
        %v1869 = vpack.c.b16 %v1833, %v1831
        %v1870 = vpack.c.b16 %v1836, %v1834
        %v1871 = vpack.c.b16 %v1837, %v1835
        %v1872 = vpack.c.b16 %v1840, %v1838
        %v1873 = vpack.c.b16 %v1841, %v1839
        %v1923 = vunpack.c.l.b16 %v1729
        %v1924 = vunpack.c.h.b16 %v1729
        %v1925 = vunpack.c.l.b16 %v1730
        %v1926 = vunpack.c.h.b16 %v1730
        %v1927 = vunpack.c.l.b16 %v1731
        %v1928 = vunpack.c.h.b16 %v1731
        %v1929 = vunpack.c.l.b16 %v1732
        %v1930 = vunpack.c.h.b16 %v1732
        %v1931 = vunpack.c.l.b16 %v1733
        %v1932 = vunpack.c.h.b16 %v1733
        %v1933 = vunpack.c.l.b16 %v1734
        %v1934 = vunpack.c.h.b16 %v1734
        %v1935 = vunpack.c.l.b16 %v1735
        %v1936 = vunpack.c.h.b16 %v1735
        %v1937 = vunpack.c.l.b16 %v1736
        %v1938 = vunpack.c.h.b16 %v1736
        %v1939 = vunpack.c.l.b16 %v1737
        %v1940 = vunpack.c.h.b16 %v1737
        %v1941 = vunpack.c.l.b16 %v1738
        %v1942 = vunpack.c.h.b16 %v1738
        %v1943 = vunpack.c.l.b16 %v1739
        %v1944 = vunpack.c.h.b16 %v1739
        %v1945 = vunpack.c.l.b16 %v1740
        %v1946 = vunpack.c.h.b16 %v1740
        %v1947 = vunpack.c.l.b16 %v1741
        %v1948 = vunpack.c.h.b16 %v1741
        %v1949 = vunpack.c.l.b16 %v1742
        %v1950 = vunpack.c.h.b16 %v1742
        %v1951 = vunpack.c.l.b16 %v1743
        %v1952 = vunpack.c.h.b16 %v1743
        %v1953 = vunpack.c.l.b16 %v1744
        %v1954 = vunpack.c.h.b16 %v1744
        %v1955 = vunpack.c.l.b16 %v1745
        %v1956 = vunpack.c.h.b16 %v1745
        %v1957 = vpack.c.b16 %v1925, %v1923
        %v1958 = vpack.c.b16 %v1926, %v1924
        %v1959 = vpack.c.b16 %v1929, %v1927
        %v1960 = vpack.c.b16 %v1930, %v1928
        %v1961 = vpack.c.b16 %v1933, %v1931
        %v1962 = vpack.c.b16 %v1934, %v1932
        %v1963 = vpack.c.b16 %v1937, %v1935
        %v1964 = vpack.c.b16 %v1938, %v1936
        %v1965 = vpack.c.b16 %v1941, %v1939
        %v1966 = vpack.c.b16 %v1942, %v1940
        %v1967 = vpack.c.b16 %v1945, %v1943
        %v1968 = vpack.c.b16 %v1946, %v1944
        %v1969 = vpack.c.b16 %v1949, %v1947
        %v1970 = vpack.c.b16 %v1950, %v1948
        %v1971 = vpack.c.b16 %v1953, %v1951
        %v1972 = vpack.c.b16 %v1954, %v1952
        %v1973 = vpack.c.b16 %v1955, %v1955
        %v1974 = vpack.c.b16 %v1956, %v1956
        %v1976 = vshrl.u32 %v1957, 16
        %v1978 = vshll.u32 %v1957, 16
        %v1980 = vrot.slane %v1978, 1
        %v1981 = vor.u32 %v1976, %v1980
        %v1983 = vshll.u32 %v1959, 16
        %v1985 = vrot.slane %v1983, 1
        %v1986 = vsel %vm1350, %v1981, %v1985
        %v1988 = vshrl.u32 %v1958, 16
        %v1990 = vshll.u32 %v1958, 16
        %v1992 = vrot.slane %v1990, 1
        %v1993 = vor.u32 %v1988, %v1992
        %v1995 = vshll.u32 %v1960, 16
        %v1997 = vrot.slane %v1995, 1
        %v1998 = vsel %vm1350, %v1993, %v1997
        %v1999 = vshrl.u32 %v1959, 16
        %v2001 = vor.u32 %v1999, %v1985
        %v2003 = vshll.u32 %v1961, 16
        %v2005 = vrot.slane %v2003, 1
        %v2006 = vsel %vm1350, %v2001, %v2005
        %v2007 = vshrl.u32 %v1960, 16
        %v2009 = vor.u32 %v2007, %v1997
        %v2011 = vshll.u32 %v1962, 16
        %v2013 = vrot.slane %v2011, 1
        %v2014 = vsel %vm1350, %v2009, %v2013
        %v2015 = vshrl.u32 %v1961, 16
        %v2017 = vor.u32 %v2015, %v2005
        %v2019 = vshll.u32 %v1963, 16
        %v2021 = vrot.slane %v2019, 1
        %v2022 = vsel %vm1350, %v2017, %v2021
        %v2023 = vshrl.u32 %v1962, 16
        %v2025 = vor.u32 %v2023, %v2013
        %v2027 = vshll.u32 %v1964, 16
        %v2029 = vrot.slane %v2027, 1
        %v2030 = vsel %vm1350, %v2025, %v2029
        %v2031 = vshrl.u32 %v1963, 16
        %v2033 = vor.u32 %v2031, %v2021
        %v2035 = vshll.u32 %v1965, 16
        %v2037 = vrot.slane %v2035, 1
        %v2038 = vsel %vm1350, %v2033, %v2037
        %v2039 = vshrl.u32 %v1964, 16
        %v2041 = vor.u32 %v2039, %v2029
        %v2043 = vshll.u32 %v1966, 16
        %v2045 = vrot.slane %v2043, 1
        %v2046 = vsel %vm1350, %v2041, %v2045
        %v2047 = vshrl.u32 %v1965, 16
        %v2049 = vor.u32 %v2047, %v2037
        %v2051 = vshll.u32 %v1967, 16
        %v2053 = vrot.slane %v2051, 1
        %v2054 = vsel %vm1350, %v2049, %v2053
        %v2055 = vshrl.u32 %v1966, 16
        %v2057 = vor.u32 %v2055, %v2045
        %v2059 = vshll.u32 %v1968, 16
        %v2061 = vrot.slane %v2059, 1
        %v2062 = vsel %vm1350, %v2057, %v2061
        %v2063 = vshrl.u32 %v1967, 16
        %v2065 = vor.u32 %v2063, %v2053
        %v2067 = vshll.u32 %v1969, 16
        %v2069 = vrot.slane %v2067, 1
        %v2070 = vsel %vm1350, %v2065, %v2069
        %v2071 = vshrl.u32 %v1968, 16
        %v2073 = vor.u32 %v2071, %v2061
        %v2075 = vshll.u32 %v1970, 16
        %v2077 = vrot.slane %v2075, 1
        %v2078 = vsel %vm1350, %v2073, %v2077
        %v2079 = vshrl.u32 %v1969, 16
        %v2081 = vor.u32 %v2079, %v2069
        %v2083 = vshll.u32 %v1971, 16
        %v2085 = vrot.slane %v2083, 1
        %v2086 = vsel %vm1350, %v2081, %v2085
        %v2087 = vshrl.u32 %v1970, 16
        %v2089 = vor.u32 %v2087, %v2077
        %v2091 = vshll.u32 %v1972, 16
        %v2093 = vrot.slane %v2091, 1
        %v2094 = vsel %vm1350, %v2089, %v2093
        %v2095 = vshrl.u32 %v1971, 16
        %v2097 = vor.u32 %v2095, %v2085
        %v2099 = vshll.u32 %v1973, 16
        %v2101 = vrot.slane %v2099, 1
        %v2102 = vsel %vm1350, %v2097, %v2101
        %v2103 = vshrl.u32 %v1972, 16
        %v2105 = vor.u32 %v2103, %v2093
        %v2107 = vshll.u32 %v1974, 16
        %v2109 = vrot.slane %v2107, 1
        %v2110 = vsel %vm1350, %v2105, %v2109
        %2127 = vmatprep.subr.bf16.mxu0 %v1998
        %2128 = vmatpush1.bf16.xpose.msra.mxu0 %v1986
        %2129 = vmatprep.subr.bf16.mxu0 %v2014
        %2130 = vmatpush1.bf16.xpose.msra.mxu0 %v2006
        %2131 = vmatprep.subr.bf16.mxu0 %v2030
        %2132 = vmatpush1.bf16.xpose.msra.mxu0 %v2022
        %2133 = vmatprep.subr.bf16.mxu0 %v2046
        %2134 = vmatpush1.bf16.xpose.msra.mxu0 %v2038
        %2135 = vmatprep.subr.bf16.mxu0 %v2062
        %2136 = vmatpush1.bf16.xpose.msra.mxu0 %v2054
        %2137 = vmatprep.subr.bf16.mxu0 %v2078
        %2138 = vmatpush1.bf16.xpose.msra.mxu0 %v2070
        %2139 = vmatprep.subr.bf16.mxu0 %v2094
        %2140 = vmatpush1.bf16.xpose.msra.mxu0 %v2086
        %2141 = vmatprep.subr.bf16.mxu0 %v2110
        %2142 = vmatpush1.bf16.xpose.msra.mxu0 %v2102
        %2143 = vmatprep.subr.bf16.mxu0 0
        %2144 = vmatpush1.bf16.xpose.msra.mxu0 0
        %2145 = vmatprep.subr.bf16.mxu0 0
        %2146 = vmatpush1.bf16.xpose.msra.mxu0 0
        %2147 = vmatprep.subr.bf16.mxu0 0
        %2148 = vmatpush1.bf16.xpose.msra.mxu0 0
        %2149 = vmatprep.subr.bf16.mxu0 0
        %2150 = vmatpush1.bf16.xpose.msra.mxu0 0
        %2151 = vmatprep.subr.bf16.mxu0 0
        %2152 = vmatpush1.bf16.xpose.msra.mxu0 0
        %2153 = vmatprep.subr.bf16.mxu0 0
        %2154 = vmatpush1.bf16.xpose.msra.mxu0 0
        %2155 = vmatprep.subr.bf16.mxu0 0
        %2156 = vmatpush1.bf16.xpose.msra.mxu0 0
        %2157 = vmatprep.subr.bf16.mxu0 0
        %2158 = vmatpush1.bf16.xpose.msra.mxu0 0
        %2159 = vmatprep.mubr.bf16.mxu0 %v1843
        %2160 = vmatmul.mubr.bf16.gmra.mrb[0].mxu0 %v1842
        %v2161 = vpop.f32.mrb[0].mxu0
        %v2162 = vadd.f32 0.0, %v2161
        %v2163 = vpop.f32.mrb[0].mxu0
        %v2164 = vpop.f32.mrb[0].mxu0
        %v2165 = vadd.f32 0.0, %v2164
        %v2166 = vpop.f32.mrb[0].mxu0
        %2167 = vmatprep.mubr.bf16.mxu0 %v1845
        %2168 = vmatmul.mubr.bf16.gmra.mrb[0].mxu0 %v1844
        %v2169 = vpop.f32.mrb[0].mxu0
        %v2170 = vadd.f32 0.0, %v2169
        %v2171 = vpop.f32.mrb[0].mxu0
        %v2172 = vpop.f32.mrb[0].mxu0
        %v2173 = vadd.f32 0.0, %v2172
        %v2174 = vpop.f32.mrb[0].mxu0
        %2175 = vmatprep.mubr.bf16.mxu0 %v1847
        %2176 = vmatmul.mubr.bf16.gmra.mrb[0].mxu0 %v1846
        %v2177 = vpop.f32.mrb[0].mxu0
        %v2178 = vadd.f32 0.0, %v2177
        %v2179 = vpop.f32.mrb[0].mxu0
        %v2180 = vpop.f32.mrb[0].mxu0
        %v2181 = vadd.f32 0.0, %v2180
        %v2182 = vpop.f32.mrb[0].mxu0
        %2183 = vmatprep.mubr.bf16.mxu0 %v1849
        %2184 = vmatmul.mubr.bf16.gmra.mrb[0].mxu0 %v1848
        %v2185 = vpop.f32.mrb[0].mxu0
        %v2186 = vadd.f32 0.0, %v2185
        %v2187 = vpop.f32.mrb[0].mxu0
        %v2188 = vpop.f32.mrb[0].mxu0
        %v2189 = vadd.f32 0.0, %v2188
        %v2190 = vpop.f32.mrb[0].mxu0
        %2191 = vmatprep.mubr.bf16.mxu0 %v1851
        %2192 = vmatmul.mubr.bf16.gmra.mrb[0].mxu0 %v1850
        %v2193 = vpop.f32.mrb[0].mxu0
        %v2194 = vadd.f32 0.0, %v2193
        %v2195 = vpop.f32.mrb[0].mxu0
        %v2196 = vpop.f32.mrb[0].mxu0
        %v2197 = vadd.f32 0.0, %v2196
        %v2198 = vpop.f32.mrb[0].mxu0
        %2199 = vmatprep.mubr.bf16.mxu0 %v1853
        %2200 = vmatmul.mubr.bf16.gmra.mrb[0].mxu0 %v1852
        %v2201 = vpop.f32.mrb[0].mxu0
        %v2202 = vadd.f32 0.0, %v2201
        %v2203 = vpop.f32.mrb[0].mxu0
        %v2204 = vpop.f32.mrb[0].mxu0
        %v2205 = vadd.f32 0.0, %v2204
        %v2206 = vpop.f32.mrb[0].mxu0
        %2207 = vmatprep.mubr.bf16.mxu0 %v1855
        %2208 = vmatmul.mubr.bf16.gmra.mrb[0].mxu0 %v1854
        %v2209 = vpop.f32.mrb[0].mxu0
        %v2210 = vadd.f32 0.0, %v2209
        %v2211 = vpop.f32.mrb[0].mxu0
        %v2212 = vpop.f32.mrb[0].mxu0
        %v2213 = vadd.f32 0.0, %v2212
        %v2214 = vpop.f32.mrb[0].mxu0
        %2215 = vmatprep.mubr.bf16.mxu0 %v1857
        %2216 = vmatmul.mubr.bf16.gmra.mrb[0].mxu0 %v1856
        %v2217 = vpop.f32.mrb[0].mxu0
        %v2218 = vadd.f32 0.0, %v2217
        %v2219 = vpop.f32.mrb[0].mxu0
        %v2220 = vpop.f32.mrb[0].mxu0
        %v2221 = vadd.f32 0.0, %v2220
        %v2222 = vpop.f32.mrb[0].mxu0
        %2223 = vmatprep.mubr.bf16.mxu0 %v1859
        %2224 = vmatmul.mubr.bf16.gmra.mrb[0].mxu0 %v1858
        %v2225 = vpop.f32.mrb[0].mxu0
        %v2226 = vadd.f32 0.0, %v2225
        %v2227 = vpop.f32.mrb[0].mxu0
        %v2228 = vpop.f32.mrb[0].mxu0
        %v2229 = vadd.f32 0.0, %v2228
        %v2230 = vpop.f32.mrb[0].mxu0
        %2231 = vmatprep.mubr.bf16.mxu0 %v1861
        %2232 = vmatmul.mubr.bf16.gmra.mrb[0].mxu0 %v1860
        %v2233 = vpop.f32.mrb[0].mxu0
        %v2234 = vadd.f32 0.0, %v2233
        %v2235 = vpop.f32.mrb[0].mxu0
        %v2236 = vpop.f32.mrb[0].mxu0
        %v2237 = vadd.f32 0.0, %v2236
        %v2238 = vpop.f32.mrb[0].mxu0
        %2239 = vmatprep.mubr.bf16.mxu0 %v1863
        %2240 = vmatmul.mubr.bf16.gmra.mrb[0].mxu0 %v1862
        %v2241 = vpop.f32.mrb[0].mxu0
        %v2242 = vadd.f32 0.0, %v2241
        %v2243 = vpop.f32.mrb[0].mxu0
        %v2244 = vpop.f32.mrb[0].mxu0
        %v2245 = vadd.f32 0.0, %v2244
        %v2246 = vpop.f32.mrb[0].mxu0
        %2247 = vmatprep.mubr.bf16.mxu0 %v1865
        %2248 = vmatmul.mubr.bf16.gmra.mrb[0].mxu0 %v1864
        %v2249 = vpop.f32.mrb[0].mxu0
        %v2250 = vadd.f32 0.0, %v2249
        %v2251 = vpop.f32.mrb[0].mxu0
        %v2252 = vpop.f32.mrb[0].mxu0
        %v2253 = vadd.f32 0.0, %v2252
        %v2254 = vpop.f32.mrb[0].mxu0
        %2255 = vmatprep.mubr.bf16.mxu0 %v1867
        %2256 = vmatmul.mubr.bf16.gmra.mrb[0].mxu0 %v1866
        %v2257 = vpop.f32.mrb[0].mxu0
        %v2258 = vadd.f32 0.0, %v2257
        %v2259 = vpop.f32.mrb[0].mxu0
        %v2260 = vpop.f32.mrb[0].mxu0
        %v2261 = vadd.f32 0.0, %v2260
        %v2262 = vpop.f32.mrb[0].mxu0
        %2263 = vmatprep.mubr.bf16.mxu0 %v1869
        %2264 = vmatmul.mubr.bf16.gmra.mrb[0].mxu0 %v1868
        %v2265 = vpop.f32.mrb[0].mxu0
        %v2266 = vadd.f32 0.0, %v2265
        %v2267 = vpop.f32.mrb[0].mxu0
        %v2268 = vpop.f32.mrb[0].mxu0
        %v2269 = vadd.f32 0.0, %v2268
        %v2270 = vpop.f32.mrb[0].mxu0
        %2271 = vmatprep.mubr.bf16.mxu0 %v1871
        %2272 = vmatmul.mubr.bf16.gmra.mrb[0].mxu0 %v1870
        %v2273 = vpop.f32.mrb[0].mxu0
        %v2274 = vadd.f32 0.0, %v2273
        %v2275 = vpop.f32.mrb[0].mxu0
        %v2276 = vpop.f32.mrb[0].mxu0
        %v2277 = vadd.f32 0.0, %v2276
        %v2278 = vpop.f32.mrb[0].mxu0
        %2279 = vmatprep.mubr.bf16.mxu0 %v1873
        %2280 = vmatmul.mubr.bf16.gmra.mrb[0].mxu0 %v1872
        %v2281 = vpop.f32.mrb[0].mxu0
        %v2282 = vadd.f32 0.0, %v2281
        %v2283 = vpop.f32.mrb[0].mxu0
        %v2284 = vpop.f32.mrb[0].mxu0
        %v2285 = vadd.f32 0.0, %v2284
        %v2286 = vpop.f32.mrb[0].mxu0
        %2287 = vdwg.mxu0
        %v2288 = vadd.f32 %v1664, %v2162
        %v2289 = vadd.f32 %v1665, %v2165
        %v2290 = vadd.f32 %v1666, %v2170
        %v2291 = vadd.f32 %v1667, %v2173
        %v2292 = vadd.f32 %v1668, %v2178
        %v2293 = vadd.f32 %v1669, %v2181
        %v2294 = vadd.f32 %v1670, %v2186
        %v2295 = vadd.f32 %v1671, %v2189
        %v2296 = vadd.f32 %v1672, %v2194
        %v2297 = vadd.f32 %v1673, %v2197
        %v2298 = vadd.f32 %v1674, %v2202
        %v2299 = vadd.f32 %v1675, %v2205
        %v2300 = vadd.f32 %v1676, %v2210
        %v2301 = vadd.f32 %v1677, %v2213
        %v2302 = vadd.f32 %v1678, %v2218
        %v2303 = vadd.f32 %v1679, %v2221
        %v2304 = vadd.f32 %v1680, %v2226
        %v2305 = vadd.f32 %v1681, %v2229
        %v2306 = vadd.f32 %v1682, %v2234
        %v2307 = vadd.f32 %v1683, %v2237
        %v2308 = vadd.f32 %v1684, %v2242
        %v2309 = vadd.f32 %v1685, %v2245
        %v2310 = vadd.f32 %v1686, %v2250
        %v2311 = vadd.f32 %v1687, %v2253
        %v2312 = vadd.f32 %v1688, %v2258
        %v2313 = vadd.f32 %v1689, %v2261
        %v2314 = vadd.f32 %v1690, %v2266
        %v2315 = vadd.f32 %v1691, %v2269
        %v2316 = vadd.f32 %v1692, %v2274
        %v2317 = vadd.f32 %v1693, %v2277
        %v2318 = vadd.f32 %v1694, %v2282
        %v2319 = vadd.f32 %v1695, %v2285
        %s2320 = scalar_lea.vmem %s1, 1024
        %v2321 = vld [vmem:[%s2320] sm:$0xff]
        %v2322 = vld [vmem:[%s2320 + $0x8] sm:$0xff]
        %v2323 = vld [vmem:[%s2320 + $0x10] sm:$0xff]
        %v2324 = vld [vmem:[%s2320 + $0x18] sm:$0xff]
        %v2325 = vld [vmem:[%s2320 + $0x20] sm:$0xff]
        %v2326 = vld [vmem:[%s2320 + $0x28] sm:$0xff]
        %v2327 = vld [vmem:[%s2320 + $0x30] sm:$0xff]
        %v2328 = vld [vmem:[%s2320 + $0x38] sm:$0xff]
        %v2329 = vld [vmem:[%s2320 + $0x40] sm:$0xff]
        %v2330 = vld [vmem:[%s2320 + $0x48] sm:$0xff]
        %v2331 = vld [vmem:[%s2320 + $0x50] sm:$0xff]
        %v2332 = vld [vmem:[%s2320 + $0x58] sm:$0xff]
        %v2333 = vld [vmem:[%s2320 + $0x60] sm:$0xff]
        %v2334 = vld [vmem:[%s2320 + $0x68] sm:$0xff]
        %v2335 = vld [vmem:[%s2320 + $0x70] sm:$0xff]
        %v2336 = vld [vmem:[%s2320 + $0x78] sm:$0xff]
        %v2337 = vld [vmem:[%s2320 + $0x80] sm:$0xff]
        %v2338 = vld [vmem:[%s2320 + $0x88] sm:$0xff]
        %v2339 = vld [vmem:[%s2320 + $0x90] sm:$0xff]
        %v2340 = vld [vmem:[%s2320 + $0x98] sm:$0xff]
        %v2341 = vld [vmem:[%s2320 + $0xa0] sm:$0xff]
        %v2342 = vld [vmem:[%s2320 + $0xa8] sm:$0xff]
        %v2343 = vld [vmem:[%s2320 + $0xb0] sm:$0xff]
        %v2344 = vld [vmem:[%s2320 + $0xb8] sm:$0xff]
        %v2345 = vld [vmem:[%s2320 + $0xc0] sm:$0xff]
        %v2346 = vld [vmem:[%s2320 + $0xc8] sm:$0xff]
        %v2347 = vld [vmem:[%s2320 + $0xd0] sm:$0xff]
        %v2348 = vld [vmem:[%s2320 + $0xd8] sm:$0xff]
        %v2349 = vld [vmem:[%s2320 + $0xe0] sm:$0xff]
        %v2350 = vld [vmem:[%s2320 + $0xe8] sm:$0xff]
        %v2351 = vld [vmem:[%s2320 + $0xf0] sm:$0xff]
        %v2352 = vld [vmem:[%s2320 + $0xf8] sm:$0xff]
        %v2353 = vld [vmem:[%s169] sm:$0xee]
        %v2386 = vunpack.c.l.b16 %v2321
        %v2387 = vunpack.c.h.b16 %v2321
        %v2388 = vunpack.c.l.b16 %v2322
        %v2389 = vunpack.c.h.b16 %v2322
        %v2390 = vunpack.c.l.b16 %v2323
        %v2391 = vunpack.c.h.b16 %v2323
        %v2392 = vunpack.c.l.b16 %v2324
        %v2393 = vunpack.c.h.b16 %v2324
        %v2394 = vunpack.c.l.b16 %v2325
        %v2395 = vunpack.c.h.b16 %v2325
        %v2396 = vunpack.c.l.b16 %v2326
        %v2397 = vunpack.c.h.b16 %v2326
        %v2398 = vunpack.c.l.b16 %v2327
        %v2399 = vunpack.c.h.b16 %v2327
        %v2400 = vunpack.c.l.b16 %v2328
        %v2401 = vunpack.c.h.b16 %v2328
        %v2402 = vunpack.c.l.b16 %v2329
        %v2403 = vunpack.c.h.b16 %v2329
        %v2404 = vunpack.c.l.b16 %v2330
        %v2405 = vunpack.c.h.b16 %v2330
        %v2406 = vunpack.c.l.b16 %v2331
        %v2407 = vunpack.c.h.b16 %v2331
        %v2408 = vunpack.c.l.b16 %v2332
        %v2409 = vunpack.c.h.b16 %v2332
        %v2410 = vunpack.c.l.b16 %v2333
        %v2411 = vunpack.c.h.b16 %v2333
        %v2412 = vunpack.c.l.b16 %v2334
        %v2413 = vunpack.c.h.b16 %v2334
        %v2414 = vunpack.c.l.b16 %v2335
        %v2415 = vunpack.c.h.b16 %v2335
        %v2416 = vunpack.c.l.b16 %v2336
        %v2417 = vunpack.c.h.b16 %v2336
        %v2418 = vunpack.c.l.b16 %v2337
        %v2419 = vunpack.c.h.b16 %v2337
        %v2420 = vunpack.c.l.b16 %v2338
        %v2421 = vunpack.c.h.b16 %v2338
        %v2422 = vunpack.c.l.b16 %v2339
        %v2423 = vunpack.c.h.b16 %v2339
        %v2424 = vunpack.c.l.b16 %v2340
        %v2425 = vunpack.c.h.b16 %v2340
        %v2426 = vunpack.c.l.b16 %v2341
        %v2427 = vunpack.c.h.b16 %v2341
        %v2428 = vunpack.c.l.b16 %v2342
        %v2429 = vunpack.c.h.b16 %v2342
        %v2430 = vunpack.c.l.b16 %v2343
        %v2431 = vunpack.c.h.b16 %v2343
        %v2432 = vunpack.c.l.b16 %v2344
        %v2433 = vunpack.c.h.b16 %v2344
        %v2434 = vunpack.c.l.b16 %v2345
        %v2435 = vunpack.c.h.b16 %v2345
        %v2436 = vunpack.c.l.b16 %v2346
        %v2437 = vunpack.c.h.b16 %v2346
        %v2438 = vunpack.c.l.b16 %v2347
        %v2439 = vunpack.c.h.b16 %v2347
        %v2440 = vunpack.c.l.b16 %v2348
        %v2441 = vunpack.c.h.b16 %v2348
        %v2442 = vunpack.c.l.b16 %v2349
        %v2443 = vunpack.c.h.b16 %v2349
        %v2444 = vunpack.c.l.b16 %v2350
        %v2445 = vunpack.c.h.b16 %v2350
        %v2446 = vunpack.c.l.b16 %v2351
        %v2447 = vunpack.c.h.b16 %v2351
        %v2448 = vunpack.c.l.b16 %v2352
        %v2449 = vunpack.c.h.b16 %v2352
        %v2450 = vpack.c.b16 %v2388, %v2386
        %v2451 = vpack.c.b16 %v2389, %v2387
        %v2452 = vpack.c.b16 %v2392, %v2390
        %v2453 = vpack.c.b16 %v2393, %v2391
        %v2454 = vpack.c.b16 %v2396, %v2394
        %v2455 = vpack.c.b16 %v2397, %v2395
        %v2456 = vpack.c.b16 %v2400, %v2398
        %v2457 = vpack.c.b16 %v2401, %v2399
        %v2458 = vpack.c.b16 %v2404, %v2402
        %v2459 = vpack.c.b16 %v2405, %v2403
        %v2460 = vpack.c.b16 %v2408, %v2406
        %v2461 = vpack.c.b16 %v2409, %v2407
        %v2462 = vpack.c.b16 %v2412, %v2410
        %v2463 = vpack.c.b16 %v2413, %v2411
        %v2464 = vpack.c.b16 %v2416, %v2414
        %v2465 = vpack.c.b16 %v2417, %v2415
        %v2466 = vpack.c.b16 %v2420, %v2418
        %v2467 = vpack.c.b16 %v2421, %v2419
        %v2468 = vpack.c.b16 %v2424, %v2422
        %v2469 = vpack.c.b16 %v2425, %v2423
        %v2470 = vpack.c.b16 %v2428, %v2426
        %v2471 = vpack.c.b16 %v2429, %v2427
        %v2472 = vpack.c.b16 %v2432, %v2430
        %v2473 = vpack.c.b16 %v2433, %v2431
        %v2474 = vpack.c.b16 %v2436, %v2434
        %v2475 = vpack.c.b16 %v2437, %v2435
        %v2476 = vpack.c.b16 %v2440, %v2438
        %v2477 = vpack.c.b16 %v2441, %v2439
        %v2478 = vpack.c.b16 %v2444, %v2442
        %v2479 = vpack.c.b16 %v2445, %v2443
        %v2480 = vpack.c.b16 %v2448, %v2446
        %v2481 = vpack.c.b16 %v2449, %v2447
        %v2515 = vunpack.c.l.b16 %v2353
        %v2516 = vunpack.c.h.b16 %v2353
        %v2517 = vpack.c.b16 %v1300, %v2515
        %v2518 = vpack.c.b16 %v1301, %v2516
        %vm2519 = vcmask 1046528
        %v2520 = vrot.slane %v2517, 1
        %v2521 = vrot.slane %v1334, 1
        %v2522 = vsel %vm2519, %v2520, %v2521
        %v2523 = vrot.slane %v2518, 1
        %v2524 = vrot.slane %v1335, 1
        %v2525 = vsel %vm2519, %v2523, %v2524
        %v2526 = vrot.slane %v1336, 1
        %v2527 = vsel %vm2519, %v2521, %v2526
        %v2528 = vrot.slane %v1337, 1
        %v2529 = vsel %vm2519, %v2524, %v2528
        %v2530 = vrot.slane %v1338, 1
        %v2531 = vsel %vm2519, %v2526, %v2530
        %v2532 = vrot.slane %v1339, 1
        %v2533 = vsel %vm2519, %v2528, %v2532
        %v2534 = vrot.slane %v1340, 1
        %v2535 = vsel %vm2519, %v2530, %v2534
        %v2536 = vrot.slane %v1341, 1
        %v2537 = vsel %vm2519, %v2532, %v2536
        %v2538 = vrot.slane %v1342, 1
        %v2539 = vsel %vm2519, %v2534, %v2538
        %v2540 = vrot.slane %v1343, 1
        %v2541 = vsel %vm2519, %v2536, %v2540
        %v2542 = vrot.slane %v1344, 1
        %v2543 = vsel %vm2519, %v2538, %v2542
        %v2544 = vrot.slane %v1345, 1
        %v2545 = vsel %vm2519, %v2540, %v2544
        %v2546 = vrot.slane %v1346, 1
        %v2547 = vsel %vm2519, %v2542, %v2546
        %v2548 = vrot.slane %v1347, 1
        %v2549 = vsel %vm2519, %v2544, %v2548
        %v2550 = vrot.slane %v1348, 1
        %v2551 = vsel %vm2519, %v2546, %v2550
        %v2552 = vrot.slane %v1349, 1
        %v2553 = vsel %vm2519, %v2548, %v2552
        %2570 = vmatprep.subr.bf16.mxu0 %v2525
        %2571 = vmatpush1.bf16.xpose.msra.mxu0 %v2522
        %2572 = vmatprep.subr.bf16.mxu0 %v2529
        %2573 = vmatpush1.bf16.xpose.msra.mxu0 %v2527
        %2574 = vmatprep.subr.bf16.mxu0 %v2533
        %2575 = vmatpush1.bf16.xpose.msra.mxu0 %v2531
        %2576 = vmatprep.subr.bf16.mxu0 %v2537
        %2577 = vmatpush1.bf16.xpose.msra.mxu0 %v2535
        %2578 = vmatprep.subr.bf16.mxu0 %v2541
        %2579 = vmatpush1.bf16.xpose.msra.mxu0 %v2539
        %2580 = vmatprep.subr.bf16.mxu0 %v2545
        %2581 = vmatpush1.bf16.xpose.msra.mxu0 %v2543
        %2582 = vmatprep.subr.bf16.mxu0 %v2549
        %2583 = vmatpush1.bf16.xpose.msra.mxu0 %v2547
        %2584 = vmatprep.subr.bf16.mxu0 %v2553
        %2585 = vmatpush1.bf16.xpose.msra.mxu0 %v2551
        %2586 = vmatprep.subr.bf16.mxu0 0
        %2587 = vmatpush1.bf16.xpose.msra.mxu0 0
        %2588 = vmatprep.subr.bf16.mxu0 0
        %2589 = vmatpush1.bf16.xpose.msra.mxu0 0
        %2590 = vmatprep.subr.bf16.mxu0 0
        %2591 = vmatpush1.bf16.xpose.msra.mxu0 0
        %2592 = vmatprep.subr.bf16.mxu0 0
        %2593 = vmatpush1.bf16.xpose.msra.mxu0 0
        %2594 = vmatprep.subr.bf16.mxu0 0
        %2595 = vmatpush1.bf16.xpose.msra.mxu0 0
        %2596 = vmatprep.subr.bf16.mxu0 0
        %2597 = vmatpush1.bf16.xpose.msra.mxu0 0
        %2598 = vmatprep.subr.bf16.mxu0 0
        %2599 = vmatpush1.bf16.xpose.msra.mxu0 0
        %2600 = vmatprep.subr.bf16.mxu0 0
        %2601 = vmatpush1.bf16.xpose.msra.mxu0 0
        %2602 = vmatprep.mubr.bf16.mxu0 %v2451
        %2603 = vmatmul.mubr.bf16.gmra.mrb[0].mxu0 %v2450
        %v2604 = vpop.f32.mrb[0].mxu0
        %v2605 = vadd.f32 0.0, %v2604
        %v2606 = vpop.f32.mrb[0].mxu0
        %v2607 = vpop.f32.mrb[0].mxu0
        %v2608 = vadd.f32 0.0, %v2607
        %v2609 = vpop.f32.mrb[0].mxu0
        %2610 = vmatprep.mubr.bf16.mxu0 %v2453
        %2611 = vmatmul.mubr.bf16.gmra.mrb[0].mxu0 %v2452
        %v2612 = vpop.f32.mrb[0].mxu0
        %v2613 = vadd.f32 0.0, %v2612
        %v2614 = vpop.f32.mrb[0].mxu0
        %v2615 = vpop.f32.mrb[0].mxu0
        %v2616 = vadd.f32 0.0, %v2615
        %v2617 = vpop.f32.mrb[0].mxu0
        %2618 = vmatprep.mubr.bf16.mxu0 %v2455
        %2619 = vmatmul.mubr.bf16.gmra.mrb[0].mxu0 %v2454
        %v2620 = vpop.f32.mrb[0].mxu0
        %v2621 = vadd.f32 0.0, %v2620
        %v2622 = vpop.f32.mrb[0].mxu0
        %v2623 = vpop.f32.mrb[0].mxu0
        %v2624 = vadd.f32 0.0, %v2623
        %v2625 = vpop.f32.mrb[0].mxu0
        %2626 = vmatprep.mubr.bf16.mxu0 %v2457
        %2627 = vmatmul.mubr.bf16.gmra.mrb[0].mxu0 %v2456
        %v2628 = vpop.f32.mrb[0].mxu0
        %v2629 = vadd.f32 0.0, %v2628
        %v2630 = vpop.f32.mrb[0].mxu0
        %v2631 = vpop.f32.mrb[0].mxu0
        %v2632 = vadd.f32 0.0, %v2631
        %v2633 = vpop.f32.mrb[0].mxu0
        %2634 = vmatprep.mubr.bf16.mxu0 %v2459
        %2635 = vmatmul.mubr.bf16.gmra.mrb[0].mxu0 %v2458
        %v2636 = vpop.f32.mrb[0].mxu0
        %v2637 = vadd.f32 0.0, %v2636
        %v2638 = vpop.f32.mrb[0].mxu0
        %v2639 = vpop.f32.mrb[0].mxu0
        %v2640 = vadd.f32 0.0, %v2639
        %v2641 = vpop.f32.mrb[0].mxu0
        %2642 = vmatprep.mubr.bf16.mxu0 %v2461
        %2643 = vmatmul.mubr.bf16.gmra.mrb[0].mxu0 %v2460
        %v2644 = vpop.f32.mrb[0].mxu0
        %v2645 = vadd.f32 0.0, %v2644
        %v2646 = vpop.f32.mrb[0].mxu0
        %v2647 = vpop.f32.mrb[0].mxu0
        %v2648 = vadd.f32 0.0, %v2647
        %v2649 = vpop.f32.mrb[0].mxu0
        %2650 = vmatprep.mubr.bf16.mxu0 %v2463
        %2651 = vmatmul.mubr.bf16.gmra.mrb[0].mxu0 %v2462
        %v2652 = vpop.f32.mrb[0].mxu0
        %v2653 = vadd.f32 0.0, %v2652
        %v2654 = vpop.f32.mrb[0].mxu0
        %v2655 = vpop.f32.mrb[0].mxu0
        %v2656 = vadd.f32 0.0, %v2655
        %v2657 = vpop.f32.mrb[0].mxu0
        %2658 = vmatprep.mubr.bf16.mxu0 %v2465
        %2659 = vmatmul.mubr.bf16.gmra.mrb[0].mxu0 %v2464
        %v2660 = vpop.f32.mrb[0].mxu0
        %v2661 = vadd.f32 0.0, %v2660
        %v2662 = vpop.f32.mrb[0].mxu0
        %v2663 = vpop.f32.mrb[0].mxu0
        %v2664 = vadd.f32 0.0, %v2663
        %v2665 = vpop.f32.mrb[0].mxu0
        %2666 = vmatprep.mubr.bf16.mxu0 %v2467
        %2667 = vmatmul.mubr.bf16.gmra.mrb[0].mxu0 %v2466
        %v2668 = vpop.f32.mrb[0].mxu0
        %v2669 = vadd.f32 0.0, %v2668
        %v2670 = vpop.f32.mrb[0].mxu0
        %v2671 = vpop.f32.mrb[0].mxu0
        %v2672 = vadd.f32 0.0, %v2671
        %v2673 = vpop.f32.mrb[0].mxu0
        %2674 = vmatprep.mubr.bf16.mxu0 %v2469
        %2675 = vmatmul.mubr.bf16.gmra.mrb[0].mxu0 %v2468
        %v2676 = vpop.f32.mrb[0].mxu0
        %v2677 = vadd.f32 0.0, %v2676
        %v2678 = vpop.f32.mrb[0].mxu0
        %v2679 = vpop.f32.mrb[0].mxu0
        %v2680 = vadd.f32 0.0, %v2679
        %v2681 = vpop.f32.mrb[0].mxu0
        %2682 = vmatprep.mubr.bf16.mxu0 %v2471
        %2683 = vmatmul.mubr.bf16.gmra.mrb[0].mxu0 %v2470
        %v2684 = vpop.f32.mrb[0].mxu0
        %v2685 = vadd.f32 0.0, %v2684
        %v2686 = vpop.f32.mrb[0].mxu0
        %v2687 = vpop.f32.mrb[0].mxu0
        %v2688 = vadd.f32 0.0, %v2687
        %v2689 = vpop.f32.mrb[0].mxu0
        %2690 = vmatprep.mubr.bf16.mxu0 %v2473
        %2691 = vmatmul.mubr.bf16.gmra.mrb[0].mxu0 %v2472
        %v2692 = vpop.f32.mrb[0].mxu0
        %v2693 = vadd.f32 0.0, %v2692
        %v2694 = vpop.f32.mrb[0].mxu0
        %v2695 = vpop.f32.mrb[0].mxu0
        %v2696 = vadd.f32 0.0, %v2695
        %v2697 = vpop.f32.mrb[0].mxu0
        %2698 = vmatprep.mubr.bf16.mxu0 %v2475
        %2699 = vmatmul.mubr.bf16.gmra.mrb[0].mxu0 %v2474
        %v2700 = vpop.f32.mrb[0].mxu0
        %v2701 = vadd.f32 0.0, %v2700
        %v2702 = vpop.f32.mrb[0].mxu0
        %v2703 = vpop.f32.mrb[0].mxu0
        %v2704 = vadd.f32 0.0, %v2703
        %v2705 = vpop.f32.mrb[0].mxu0
        %2706 = vmatprep.mubr.bf16.mxu0 %v2477
        %2707 = vmatmul.mubr.bf16.gmra.mrb[0].mxu0 %v2476
        %v2708 = vpop.f32.mrb[0].mxu0
        %v2709 = vadd.f32 0.0, %v2708
        %v2710 = vpop.f32.mrb[0].mxu0
        %v2711 = vpop.f32.mrb[0].mxu0
        %v2712 = vadd.f32 0.0, %v2711
        %v2713 = vpop.f32.mrb[0].mxu0
        %2714 = vmatprep.mubr.bf16.mxu0 %v2479
        %2715 = vmatmul.mubr.bf16.gmra.mrb[0].mxu0 %v2478
        %v2716 = vpop.f32.mrb[0].mxu0
        %v2717 = vadd.f32 0.0, %v2716
        %v2718 = vpop.f32.mrb[0].mxu0
        %v2719 = vpop.f32.mrb[0].mxu0
        %v2720 = vadd.f32 0.0, %v2719
        %v2721 = vpop.f32.mrb[0].mxu0
        %2722 = vmatprep.mubr.bf16.mxu0 %v2481
        %2723 = vmatmul.mubr.bf16.gmra.mrb[0].mxu0 %v2480
        %v2724 = vpop.f32.mrb[0].mxu0
        %v2725 = vadd.f32 0.0, %v2724
        %v2726 = vpop.f32.mrb[0].mxu0
        %v2727 = vpop.f32.mrb[0].mxu0
        %v2728 = vadd.f32 0.0, %v2727
        %v2729 = vpop.f32.mrb[0].mxu0
        %2730 = vdwg.mxu0
        %v2731 = vadd.f32 %v2288, %v2605
        %v2732 = vadd.f32 %v2289, %v2608
        %v2733 = vadd.f32 %v2290, %v2613
        %v2734 = vadd.f32 %v2291, %v2616
        %v2735 = vadd.f32 %v2292, %v2621
        %v2736 = vadd.f32 %v2293, %v2624
        %v2737 = vadd.f32 %v2294, %v2629
        %v2738 = vadd.f32 %v2295, %v2632
        %v2739 = vadd.f32 %v2296, %v2637
        %v2740 = vadd.f32 %v2297, %v2640
        %v2741 = vadd.f32 %v2298, %v2645
        %v2742 = vadd.f32 %v2299, %v2648
        %v2743 = vadd.f32 %v2300, %v2653
        %v2744 = vadd.f32 %v2301, %v2656
        %v2745 = vadd.f32 %v2302, %v2661
        %v2746 = vadd.f32 %v2303, %v2664
        %v2747 = vadd.f32 %v2304, %v2669
        %v2748 = vadd.f32 %v2305, %v2672
        %v2749 = vadd.f32 %v2306, %v2677
        %v2750 = vadd.f32 %v2307, %v2680
        %v2751 = vadd.f32 %v2308, %v2685
        %v2752 = vadd.f32 %v2309, %v2688
        %v2753 = vadd.f32 %v2310, %v2693
        %v2754 = vadd.f32 %v2311, %v2696
        %v2755 = vadd.f32 %v2312, %v2701
        %v2756 = vadd.f32 %v2313, %v2704
        %v2757 = vadd.f32 %v2314, %v2709
        %v2758 = vadd.f32 %v2315, %v2712
        %v2759 = vadd.f32 %v2316, %v2717
        %v2760 = vadd.f32 %v2317, %v2720
        %v2761 = vadd.f32 %v2318, %v2725
        %v2762 = vadd.f32 %v2319, %v2728
        %v2763 = vmax.f32 %v2731, 0.0
        %v2764 = vmax.f32 %v2732, 0.0
        %v2765 = vmax.f32 %v2733, 0.0
        %v2766 = vmax.f32 %v2734, 0.0
        %v2767 = vmax.f32 %v2735, 0.0
        %v2768 = vmax.f32 %v2736, 0.0
        %v2769 = vmax.f32 %v2737, 0.0
        %v2770 = vmax.f32 %v2738, 0.0
        %v2771 = vmax.f32 %v2739, 0.0
        %v2772 = vmax.f32 %v2740, 0.0
        %v2773 = vmax.f32 %v2741, 0.0
        %v2774 = vmax.f32 %v2742, 0.0
        %v2775 = vmax.f32 %v2743, 0.0
        %v2776 = vmax.f32 %v2744, 0.0
        %v2777 = vmax.f32 %v2745, 0.0
        %v2778 = vmax.f32 %v2746, 0.0
        %v2779 = vmax.f32 %v2747, 0.0
        %v2780 = vmax.f32 %v2748, 0.0
        %v2781 = vmax.f32 %v2749, 0.0
        %v2782 = vmax.f32 %v2750, 0.0
        %v2783 = vmax.f32 %v2751, 0.0
        %v2784 = vmax.f32 %v2752, 0.0
        %v2785 = vmax.f32 %v2753, 0.0
        %v2786 = vmax.f32 %v2754, 0.0
        %v2787 = vmax.f32 %v2755, 0.0
        %v2788 = vmax.f32 %v2756, 0.0
        %v2789 = vmax.f32 %v2757, 0.0
        %v2790 = vmax.f32 %v2758, 0.0
        %v2791 = vmax.f32 %v2759, 0.0
        %v2792 = vmax.f32 %v2760, 0.0
        %v2793 = vmax.f32 %v2761, 0.0
        %v2794 = vmax.f32 %v2762, 0.0
        %2795 = vst [vmem:[%s160] sm:$0xff] %v2763
        %2796 = vst [vmem:[%s160 + $0x8] sm:$0xff] %v2764
        %2797 = vst [vmem:[%s160 + $0x10] sm:$0xff] %v2765
        %2798 = vst [vmem:[%s160 + $0x18] sm:$0xff] %v2766
        %2799 = vst [vmem:[%s160 + $0x20] sm:$0xff] %v2767
        %2800 = vst [vmem:[%s160 + $0x28] sm:$0xff] %v2768
        %2801 = vst [vmem:[%s160 + $0x30] sm:$0xff] %v2769
        %2802 = vst [vmem:[%s160 + $0x38] sm:$0xff] %v2770
        %2803 = vst [vmem:[%s160 + $0x40] sm:$0xff] %v2771
        %2804 = vst [vmem:[%s160 + $0x48] sm:$0xff] %v2772
        %2805 = vst [vmem:[%s160 + $0x50] sm:$0xff] %v2773
        %2806 = vst [vmem:[%s160 + $0x58] sm:$0xff] %v2774
        %2807 = vst [vmem:[%s160 + $0x60] sm:$0xff] %v2775
        %2808 = vst [vmem:[%s160 + $0x68] sm:$0xff] %v2776
        %2809 = vst [vmem:[%s160 + $0x70] sm:$0xff] %v2777
        %2810 = vst [vmem:[%s160 + $0x78] sm:$0xff] %v2778
        %2811 = vst [vmem:[%s160 + $0x80] sm:$0xff] %v2779
        %2812 = vst [vmem:[%s160 + $0x88] sm:$0xff] %v2780
        %2813 = vst [vmem:[%s160 + $0x90] sm:$0xff] %v2781
        %2814 = vst [vmem:[%s160 + $0x98] sm:$0xff] %v2782
        %2815 = vst [vmem:[%s160 + $0xa0] sm:$0xff] %v2783
        %2816 = vst [vmem:[%s160 + $0xa8] sm:$0xff] %v2784
        %2817 = vst [vmem:[%s160 + $0xb0] sm:$0xff] %v2785
        %2818 = vst [vmem:[%s160 + $0xb8] sm:$0xff] %v2786
        %2819 = vst [vmem:[%s160 + $0xc0] sm:$0xff] %v2787
        %2820 = vst [vmem:[%s160 + $0xc8] sm:$0xff] %v2788
        %2821 = vst [vmem:[%s160 + $0xd0] sm:$0xff] %v2789
        %2822 = vst [vmem:[%s160 + $0xd8] sm:$0xff] %v2790
        %2823 = vst [vmem:[%s160 + $0xe0] sm:$0xff] %v2791
        %2824 = vst [vmem:[%s160 + $0xe8] sm:$0xff] %v2792
        %2825 = vst [vmem:[%s160 + $0xf0] sm:$0xff] %v2793
        %2826 = vst [vmem:[%s160 + $0xf8] sm:$0xff] %v2794
        %s2827 = sand.u32 %s87, 1
        %s2828 = scalar_lea.sflag [#allocation3], %s2827
        %s2829 = sand.u32 %s87, 1
        %s2830 = smul.addr %s2829, 256
        %s2831 = scalar_lea.vmem [#allocation2], %s2830
        // Predicated region
        $region29: #{linear_eca_block_reduce.1} parent=27 // pred_check
          %p2832 = pneg %p97
        $region30: #{linear_eca_block_reduce.1} parent=27 // pred_check_branch
          %2834 = sbr.rel (%p2832) target = $region32
        $region31: #{linear_eca_block_reduce.1} parent=27 // pred_region
          %s2836 = ssub.s32 4096, 4096
          %2837 = vsyncadd %s2828, %s2836
          %s2838 = smul.addr %s20, 32
          %s2839 = sadd.s32 %s21, %s2838
          %s2840 = smul.addr %s2839, 128
          %s2841 = scalar_lea.hbm %s2, %s2840
          %s2842 = sshll.u32 %s2831, 4
          %s2843 = int_to_ptr.vmem [resolvable:$true] %s2842
          %2848 = dma.vmem_to_hbm [thread:$0]  %s2843, 4096, %s2841, %s2828, 128, 128, 8
        $region32: #{linear_eca_block_reduce.1} parent=27 // pred_fallthru
          _
      $region28: #{linear_eca_block_reduce.1} parent=5 // pred_fallthru
        _
      %p2849 = scmp.le.s32.totalorder 2, %s11
      // Predicated region
      $region33: #{linear_eca_block_reduce.1} parent=5 // pred_check
        %p2850 = pneg %p2849
      $region34: #{linear_eca_block_reduce.1} parent=5 // pred_check_branch
        %2852 = sbr.rel (%p2850) target = $region36
      $region35: #{linear_eca_block_reduce.1} parent=5 // pred_region
        %s2853 = ssub.s32 %s11, 2
        // Predicated region
        $region37: #{linear_eca_block_reduce.1} parent=35 // pred_check
          %p2854 = pneg %p103
        $region38: #{linear_eca_block_reduce.1} parent=35 // pred_check_branch
          %2856 = sbr.rel (%p2854) target = $region40
        $region39: #{linear_eca_block_reduce.1} parent=35 // pred_region
          %s2857 = sand.u32 %s88, 1
          %s2858 = scalar_lea.sflag [#allocation3], %s2857
          %s2859 = sand.u32 %s88, 1
          %s2860 = smul.addr %s2859, 256
          %s2861 = scalar_lea.vmem [#allocation2], %s2860
          %2862 = dma.done %s2858, 4096
        $region40: #{linear_eca_block_reduce.1} parent=35 // pred_fallthru
          _
      $region36: #{linear_eca_block_reduce.1} parent=5 // pred_fallthru
        _
    $region6: #{linear_eca_block_reduce.1} parent=1 // loop_footer
      %s15 = sadd.s32 1, %s11
    $region7: #{linear_eca_block_reduce.1} parent=1 // loop_footer_branch
      %10 = sbr.rel target = $region3
    $region8: #{linear_eca_block_reduce.1} parent=1 // loop_exit
      _
    %2863 = vsyncpa [#allocation3], 1
    %s2864 = scalar_lea.sflag [#allocation3], 1
    %2865 = vsyncpa %s2864, 1

</llo_original>
